<compile_context>
chip_gen: v7x
topology: tpu7x:2x2x1
jax: 0.10.0
libtpu: 0.0.40
codegen_flags: <defaults>
</compile_context>

<pallas_src>
import jax
import jax.numpy as jnp
from jax import lax
from jax.experimental import pallas as pl
from jax.experimental.pallas import tpu as pltpu

T = 100              # rollout length (matches the PyTorch script)
STATE_DIM = 4        # state is [1., 0., 0., 0.] in initialize_state()
ACTION_DIM = 2       # synthetic controller output size
PAD = 128            # lane padding
SUB = 8              # sublane padding for row-vector operands


def _sim_kernel(state_ref, wc_ref, bc_ref, a_ref, b_ref, err_ref):
    """Closed-form T-step rollout; writes the scalar error lane-broadcast.

    state_ref : (SUB, PAD)  padded initial state (row 0 meaningful)
    wc_ref    : (PAD, PAD)  controller weight (state -> action), zero padded
    bc_ref    : (SUB, PAD)  controller bias (row 0 meaningful)
    a_ref     : (PAD, PAD)  dynamics state matrix, zero padded
    b_ref     : (PAD, PAD)  dynamics action matrix, zero padded
    err_ref   : (1, PAD)    output: error broadcast across lanes
    """
    f32 = jnp.float32

    # ---- fuse controller + dynamics into one affine map -------------------
    #   action = s @ Wc + bc ;  s' = s @ A + action @ B
    #   =>  s' = s @ (A + Wc @ B) + bc @ B
    b_mat = b_ref[...]
    m_eff = a_ref[...] + jnp.dot(wc_ref[...], b_mat, preferred_element_type=f32)
    c_eff = jnp.dot(bc_ref[...], b_mat, preferred_element_type=f32)   # (SUB, PAD)

    # ---- close the recurrence with matrix-power doubling ------------------
    #   P(n) = M^n ;  S(n) = I + M + ... + M^(n-1)
    #   s_T  = s_0 @ P(T) + c @ S(T)
    rows = lax.broadcasted_iota(jnp.int32, (PAD, PAD), 0)
    cols = lax.broadcasted_iota(jnp.int32, (PAD, PAD), 1)
    eye = jnp.where(rows == cols, 1.0, 0.0).astype(f32)

    p_mat = m_eff        # P(1) = M
    s_mat = eye          # S(1) = I
    for bit in bin(T)[3:]:                      # trace-time unrolled (T static)
        # n -> 2n :   S(2n) = S(n) + S(n) @ P(n) ;  P(2n) = P(n) @ P(n)
        s_mat = s_mat + jnp.dot(s_mat, p_mat, preferred_element_type=f32)
        p_mat = jnp.dot(p_mat, p_mat, preferred_element_type=f32)
        if bit == "1":
            # 2n -> 2n+1 :  S(2n+1) = S(2n) + P(2n) ;  P(2n+1) = P(2n) @ M
            s_mat = s_mat + p_mat
            p_mat = jnp.dot(p_mat, m_eff, preferred_element_type=f32)

    final = (jnp.dot(state_ref[...], p_mat, preferred_element_type=f32)
             + jnp.dot(c_eff, s_mat, preferred_element_type=f32))     # (SUB, PAD)

    # Padded rows/lanes are exactly zero, so the full reduction equals
    # state[0]^2 + state[1]^2 + state[2]^2 + state[3]^2.
    err = jnp.sum(final * final).reshape(1, 1)
    err_ref[...] = jnp.broadcast_to(err, (1, PAD))     # lane-dense store


def simulation_forward(state4, wc, bc, a_mat, b_mat):
    """Wrapper: pads tiny operands and invokes the single-shot Pallas kernel."""
    state_p = jnp.zeros((SUB, PAD), jnp.float32).at[0, :STATE_DIM].set(state4)
    wc_p = jnp.zeros((PAD, PAD), jnp.float32).at[:STATE_DIM, :ACTION_DIM].set(wc)
    bc_p = jnp.zeros((SUB, PAD), jnp.float32).at[0, :ACTION_DIM].set(bc)
    a_p = jnp.zeros((PAD, PAD), jnp.float32).at[:STATE_DIM, :STATE_DIM].set(a_mat)
    b_p = jnp.zeros((PAD, PAD), jnp.float32).at[:ACTION_DIM, :STATE_DIM].set(b_mat)

    vmem = pltpu.MemorySpace.VMEM
    err_row = pl.pallas_call(
        _sim_kernel,
        out_shape=jax.ShapeDtypeStruct((1, PAD), jnp.float32),
        in_specs=[pl.BlockSpec(memory_space=vmem)] * 5,
        out_specs=pl.BlockSpec(memory_space=vmem),
    )(state_p, wc_p, bc_p, a_p, b_p)
    return err_row[0, 0]


def _reference_forward(state4, wc, bc, a_mat, b_mat):
    """Plain-JAX replica of Simulation.forward for verification."""
    s = state4
    for _ in range(T):
        action = s @ wc + bc
        s = s @ a_mat + action @ b_mat
    return jnp.sum(s * s)


if __name__ == "__main__":
    key = jax.random.PRNGKey(0)
    k1, k2, k3, k4 = jax.random.split(key, 4)

    # Deterministic synthetic parameters (controller: 4->2, dynamics linear),
    # scaled so the 100-step rollout stays numerically tame.
    wc = 0.1 * jax.random.normal(k1, (STATE_DIM, ACTION_DIM), jnp.float32)
    bc = 0.1 * jax.random.normal(k2, (ACTION_DIM,), jnp.float32)
    a_mat = 0.2 * jax.random.normal(k3, (STATE_DIM, STATE_DIM), jnp.float32)
    b_mat = 0.1 * jax.random.normal(k4, (ACTION_DIM, STATE_DIM), jnp.float32)

    # Simulation.initialize_state()
    state0 = jnp.array([1.0, 0.0, 0.0, 0.0], dtype=jnp.float32)

    err = simulation_forward(state0, wc, bc, a_mat, b_mat)
    jax.block_until_ready(err)

    ref = _reference_forward(state0, wc, bc, a_mat, b_mat)
    # Slightly looser rtol than before: the fused / repeated-squaring form
    # reassociates the f32 arithmetic relative to the sequential rollout.
    assert jnp.allclose(err, ref, rtol=1e-4, atol=1e-6), (err, ref)

    print("KERNEL_OK")
</pallas_src>

<mosaic_0001>
module attributes {stable_mosaic.version = 11 : i64} {
  func.func @_sim_kernel(%arg0: memref<8x128xf32, #tpu.memory_space<vmem>>, %arg1: memref<128x128xf32, #tpu.memory_space<vmem>>, %arg2: memref<8x128xf32, #tpu.memory_space<vmem>>, %arg3: memref<128x128xf32, #tpu.memory_space<vmem>>, %arg4: memref<128x128xf32, #tpu.memory_space<vmem>>, %arg5: memref<1x128xf32, #tpu.memory_space<vmem>>) attributes {dimension_semantics = [], scalar_prefetch = 0 : i64, scratch_operands = 0 : i64, tpu.core_type = #tpu.core_type<tc>} {
    %c0 = arith.constant 0 : index
    %c0_0 = arith.constant 0 : index
    %0 = vector.load %arg4[%c0, %c0_0] : memref<128x128xf32, #tpu.memory_space<vmem>>, vector<128x128xf32>
    %c0_1 = arith.constant 0 : index
    %c0_2 = arith.constant 0 : index
    %1 = vector.load %arg3[%c0_1, %c0_2] : memref<128x128xf32, #tpu.memory_space<vmem>>, vector<128x128xf32>
    %c0_3 = arith.constant 0 : index
    %c0_4 = arith.constant 0 : index
    %2 = vector.load %arg1[%c0_3, %c0_4] : memref<128x128xf32, #tpu.memory_space<vmem>>, vector<128x128xf32>
    %cst = arith.constant dense<0.000000e+00> : vector<128x128xf32>
    %3 = tpu.matmul %2, %0, %cst {dimension_numbers = #tpu.dot_dimension_numbers<[1], [0], [0], [1], [0, 0, 1, 1], [], []>} : vector<128x128xf32>, vector<128x128xf32>, vector<128x128xf32> -> vector<128x128xf32>
    %4 = arith.addf %1, %3 : vector<128x128xf32>
    %c0_5 = arith.constant 0 : index
    %c0_6 = arith.constant 0 : index
    %5 = vector.load %arg2[%c0_5, %c0_6] : memref<8x128xf32, #tpu.memory_space<vmem>>, vector<8x128xf32>
    %cst_7 = arith.constant dense<0.000000e+00> : vector<8x128xf32>
    %6 = tpu.matmul %5, %0, %cst_7 {dimension_numbers = #tpu.dot_dimension_numbers<[1], [0], [0], [1], [0, 0, 1, 1], [], []>} : vector<8x128xf32>, vector<128x128xf32>, vector<8x128xf32> -> vector<8x128xf32>
    %7 = tpu.iota {dimensions = array<i32: 0>} : vector<128x128xi32>
    %8 = tpu.iota {dimensions = array<i32: 1>} : vector<128x128xi32>
    %9 = arith.cmpi eq, %7, %8 : vector<128x128xi32>
    %cst_8 = arith.constant 1.000000e+00 : f32
    %cst_9 = arith.constant 0.000000e+00 : f32
    %10 = vector.broadcast %cst_8 : f32 to vector<128x128xf32>
    %11 = vector.broadcast %cst_9 : f32 to vector<128x128xf32>
    %12 = arith.select %9, %10, %11 : vector<128x128xi1>, vector<128x128xf32>
    %cst_10 = arith.constant dense<0.000000e+00> : vector<128x128xf32>
    %13 = tpu.matmul %12, %4, %cst_10 {dimension_numbers = #tpu.dot_dimension_numbers<[1], [0], [0], [1], [0, 0, 1, 1], [], []>} : vector<128x128xf32>, vector<128x128xf32>, vector<128x128xf32> -> vector<128x128xf32>
    %14 = arith.addf %12, %13 : vector<128x128xf32>
    %cst_11 = arith.constant dense<0.000000e+00> : vector<128x128xf32>
    %15 = tpu.matmul %4, %4, %cst_11 {dimension_numbers = #tpu.dot_dimension_numbers<[1], [0], [0], [1], [0, 0, 1, 1], [], []>} : vector<128x128xf32>, vector<128x128xf32>, vector<128x128xf32> -> vector<128x128xf32>
    %16 = arith.addf %14, %15 : vector<128x128xf32>
    %cst_12 = arith.constant dense<0.000000e+00> : vector<128x128xf32>
    %17 = tpu.matmul %15, %4, %cst_12 {dimension_numbers = #tpu.dot_dimension_numbers<[1], [0], [0], [1], [0, 0, 1, 1], [], []>} : vector<128x128xf32>, vector<128x128xf32>, vector<128x128xf32> -> vector<128x128xf32>
    %cst_13 = arith.constant dense<0.000000e+00> : vector<128x128xf32>
    %18 = tpu.matmul %16, %17, %cst_13 {dimension_numbers = #tpu.dot_dimension_numbers<[1], [0], [0], [1], [0, 0, 1, 1], [], []>} : vector<128x128xf32>, vector<128x128xf32>, vector<128x128xf32> -> vector<128x128xf32>
    %19 = arith.addf %16, %18 : vector<128x128xf32>
    %cst_14 = arith.constant dense<0.000000e+00> : vector<128x128xf32>
    %20 = tpu.matmul %17, %17, %cst_14 {dimension_numbers = #tpu.dot_dimension_numbers<[1], [0], [0], [1], [0, 0, 1, 1], [], []>} : vector<128x128xf32>, vector<128x128xf32>, vector<128x128xf32> -> vector<128x128xf32>
    %cst_15 = arith.constant dense<0.000000e+00> : vector<128x128xf32>
    %21 = tpu.matmul %19, %20, %cst_15 {dimension_numbers = #tpu.dot_dimension_numbers<[1], [0], [0], [1], [0, 0, 1, 1], [], []>} : vector<128x128xf32>, vector<128x128xf32>, vector<128x128xf32> -> vector<128x128xf32>
    %22 = arith.addf %19, %21 : vector<128x128xf32>
    %cst_16 = arith.constant dense<0.000000e+00> : vector<128x128xf32>
    %23 = tpu.matmul %20, %20, %cst_16 {dimension_numbers = #tpu.dot_dimension_numbers<[1], [0], [0], [1], [0, 0, 1, 1], [], []>} : vector<128x128xf32>, vector<128x128xf32>, vector<128x128xf32> -> vector<128x128xf32>
    %cst_17 = arith.constant dense<0.000000e+00> : vector<128x128xf32>
    %24 = tpu.matmul %22, %23, %cst_17 {dimension_numbers = #tpu.dot_dimension_numbers<[1], [0], [0], [1], [0, 0, 1, 1], [], []>} : vector<128x128xf32>, vector<128x128xf32>, vector<128x128xf32> -> vector<128x128xf32>
    %25 = arith.addf %22, %24 : vector<128x128xf32>
    %cst_18 = arith.constant dense<0.000000e+00> : vector<128x128xf32>
    %26 = tpu.matmul %23, %23, %cst_18 {dimension_numbers = #tpu.dot_dimension_numbers<[1], [0], [0], [1], [0, 0, 1, 1], [], []>} : vector<128x128xf32>, vector<128x128xf32>, vector<128x128xf32> -> vector<128x128xf32>
    %27 = arith.addf %25, %26 : vector<128x128xf32>
    %cst_19 = arith.constant dense<0.000000e+00> : vector<128x128xf32>
    %28 = tpu.matmul %26, %4, %cst_19 {dimension_numbers = #tpu.dot_dimension_numbers<[1], [0], [0], [1], [0, 0, 1, 1], [], []>} : vector<128x128xf32>, vector<128x128xf32>, vector<128x128xf32> -> vector<128x128xf32>
    %cst_20 = arith.constant dense<0.000000e+00> : vector<128x128xf32>
    %29 = tpu.matmul %27, %28, %cst_20 {dimension_numbers = #tpu.dot_dimension_numbers<[1], [0], [0], [1], [0, 0, 1, 1], [], []>} : vector<128x128xf32>, vector<128x128xf32>, vector<128x128xf32> -> vector<128x128xf32>
    %30 = arith.addf %27, %29 : vector<128x128xf32>
    %cst_21 = arith.constant dense<0.000000e+00> : vector<128x128xf32>
    %31 = tpu.matmul %28, %28, %cst_21 {dimension_numbers = #tpu.dot_dimension_numbers<[1], [0], [0], [1], [0, 0, 1, 1], [], []>} : vector<128x128xf32>, vector<128x128xf32>, vector<128x128xf32> -> vector<128x128xf32>
    %cst_22 = arith.constant dense<0.000000e+00> : vector<128x128xf32>
    %32 = tpu.matmul %30, %31, %cst_22 {dimension_numbers = #tpu.dot_dimension_numbers<[1], [0], [0], [1], [0, 0, 1, 1], [], []>} : vector<128x128xf32>, vector<128x128xf32>, vector<128x128xf32> -> vector<128x128xf32>
    %33 = arith.addf %30, %32 : vector<128x128xf32>
    %cst_23 = arith.constant dense<0.000000e+00> : vector<128x128xf32>
    %34 = tpu.matmul %31, %31, %cst_23 {dimension_numbers = #tpu.dot_dimension_numbers<[1], [0], [0], [1], [0, 0, 1, 1], [], []>} : vector<128x128xf32>, vector<128x128xf32>, vector<128x128xf32> -> vector<128x128xf32>
    %c0_24 = arith.constant 0 : index
    %c0_25 = arith.constant 0 : index
    %35 = vector.load %arg0[%c0_24, %c0_25] : memref<8x128xf32, #tpu.memory_space<vmem>>, vector<8x128xf32>
    %cst_26 = arith.constant dense<0.000000e+00> : vector<8x128xf32>
    %36 = tpu.matmul %35, %34, %cst_26 {dimension_numbers = #tpu.dot_dimension_numbers<[1], [0], [0], [1], [0, 0, 1, 1], [], []>} : vector<8x128xf32>, vector<128x128xf32>, vector<8x128xf32> -> vector<8x128xf32>
    %cst_27 = arith.constant dense<0.000000e+00> : vector<8x128xf32>
    %37 = tpu.matmul %6, %33, %cst_27 {dimension_numbers = #tpu.dot_dimension_numbers<[1], [0], [0], [1], [0, 0, 1, 1], [], []>} : vector<8x128xf32>, vector<128x128xf32>, vector<8x128xf32> -> vector<8x128xf32>
    %38 = arith.addf %36, %37 : vector<8x128xf32>
    %39 = arith.mulf %38, %38 : vector<8x128xf32>
    %40 = vector.shape_cast %39 : vector<8x128xf32> to vector<1x8x128xf32>
    %cst_28 = arith.constant dense<0.000000e+00> : vector<1xf32>
    %41 = vector.multi_reduction <add>, %40, %cst_28 [1, 2] : vector<1x8x128xf32> to vector<1xf32>
    %42 = vector.shape_cast %41 : vector<1xf32> to vector<1x1x1xf32>
    %43 = vector.extract %42[0, 0, 0] : f32 from vector<1x1x1xf32>
    %44 = vector.broadcast %43 : f32 to vector<1x1xf32>
    %45 = vector.shape_cast %44 : vector<1x1xf32> to vector<1x1xf32>
    %46 = vector.broadcast %45 : vector<1x1xf32> to vector<1x128xf32>
    %c0_29 = arith.constant 0 : index
    %c0_30 = arith.constant 0 : index
    %47 = vector.load %arg5[%c0_29, %c0_30] : memref<1x128xf32, #tpu.memory_space<vmem>>, vector<1x128xf32>
    tpu.vector_store %arg5[%c0_29, %c0_30], %46 {strides = array<i32>} : memref<1x128xf32, #tpu.memory_space<vmem>>, vector<1x128xf32>,
    return
  }
}

</mosaic_0001>

<llo_original>
// kernel: tpu_custom_call.1
$region0: #{tpu_custom_call.1}
  #allocation0 [shape = 'u32[]', space=smem, size = 0x4, offset = 0x4, fixed_abs, tag = 'smem constant byte address 0x4 - core index']
  #allocation1 [shape = 'u32[144,128]{1,0:T(1,128)}', space=vmem, size = 0x12000, scoped, tag = 'internal scratch']
  %s0 = inlined_call_operand.hbm [shape: f32[8,128], index: 0, kind: input, shape index: {}]
  %s1 = inlined_call_operand.hbm [shape: f32[128,128], index: 1, kind: input, shape index: {}]
  %s2 = inlined_call_operand.hbm [shape: f32[8,128], index: 2, kind: input, shape index: {}]
  %s3 = inlined_call_operand.hbm [shape: f32[128,128], index: 3, kind: input, shape index: {}]
  %s4 = inlined_call_operand.hbm [shape: f32[128,128], index: 4, kind: input, shape index: {}]
  %s5 = inlined_call_operand.hbm [shape: f32[1,128], index: 5, kind: output, shape index: {}]
  %s6 = sld [smem:[#allocation0]]
  $region50: #{tpu_custom_call.1} parent=0
    _
  %s8 = ssub.s32 1, %s6
  %s9 = scalar_select 0, %s8, %s6
  $region1: #{tpu_custom_call.1} parent=0
    #allocation2 [shape = 'u8[4096]{0}', space=vmem, size = 0x1000, scoped, tag = 'input window, operand 0, single buffered']
    #allocation3 [shape = 's32[1]{0}', space=sflag, size = 0x4, scoped, tag = 'scoped memory for tpu_custom_call.1']
    #allocation4 [shape = 's32[1]{0}', space=sflag, size = 0x4, scoped, tag = 'scoped memory for tpu_custom_call.1']
    #allocation5 [shape = 'u8[65536]{0}', space=vmem, size = 0x10000, scoped, tag = 'input window, operand 1, single buffered']
    #allocation6 [shape = 's32[1]{0}', space=sflag, size = 0x4, scoped, tag = 'scoped memory for tpu_custom_call.1']
    #allocation7 [shape = 'u8[4096]{0}', space=vmem, size = 0x1000, scoped, tag = 'input window, operand 2, single buffered']
    #allocation8 [shape = 'u8[65536]{0}', space=vmem, size = 0x10000, scoped, tag = 'input window, operand 3, single buffered']
    #allocation9 [shape = 's32[1]{0}', space=sflag, size = 0x4, scoped, tag = 'scoped memory for tpu_custom_call.1']
    #allocation10 [shape = 'u8[65536]{0}', space=vmem, size = 0x10000, scoped, tag = 'input window, operand 4, single buffered']
    #allocation11 [shape = 'u8[512]{0}', space=vmem, size = 0x400, scoped, tag = 'output window, operand 0, single buffered']
    %10 = vsyncpa [#allocation3], 0
    %11 = vsyncpa [#allocation6], 0
    %12 = vsyncpa [#allocation9], 0
    %13 = vsyncpa [#allocation4], 0
    // Predicated region
    $region2: #{tpu_custom_call.1} parent=1 // pred_check
      _
    $region3: #{tpu_custom_call.1} parent=1 // pred_check_branch
      %15 = sbr.rel (0) target = $region5
    $region4: #{tpu_custom_call.1} parent=1 // pred_region
      %s17 = ssub.s32 128, 128
      %18 = vsyncadd [#allocation3], %s17
      %s20 = sshll.u32 [#allocation2], 4
      %s21 = int_to_ptr.vmem [resolvable:$true] %s20
      %23 = dma.hbm_to_vmem [thread:$0]  %s0, 128, %s21, [#allocation3]
    $region5: #{tpu_custom_call.1} parent=1 // pred_fallthru
      _
    // Predicated region
    $region6: #{tpu_custom_call.1} parent=1 // pred_check
      _
    $region7: #{tpu_custom_call.1} parent=1 // pred_check_branch
      %25 = sbr.rel (0) target = $region9
    $region8: #{tpu_custom_call.1} parent=1 // pred_region
      %s27 = ssub.s32 2048, 2048
      %28 = vsyncadd [#allocation6], %s27
      %s29 = sshll.u32 [#allocation5], 4
      %s30 = int_to_ptr.vmem [resolvable:$true] %s29
      %35 = dma.hbm_to_vmem [thread:$0]  %s1, 2048, %s30, [#allocation6], 128, 128, 8
    $region9: #{tpu_custom_call.1} parent=1 // pred_fallthru
      _
    // Predicated region
    $region10: #{tpu_custom_call.1} parent=1 // pred_check
      _
    $region11: #{tpu_custom_call.1} parent=1 // pred_check_branch
      %37 = sbr.rel (0) target = $region13
    $region12: #{tpu_custom_call.1} parent=1 // pred_region
      %s39 = ssub.s32 128, 128
      %40 = vsyncadd [#allocation6], %s39
      %s42 = sshll.u32 [#allocation7], 4
      %s43 = int_to_ptr.vmem [resolvable:$true] %s42
      %45 = dma.hbm_to_vmem [thread:$0]  %s2, 128, %s43, [#allocation6]
    $region13: #{tpu_custom_call.1} parent=1 // pred_fallthru
      _
    // Predicated region
    $region14: #{tpu_custom_call.1} parent=1 // pred_check
      _
    $region15: #{tpu_custom_call.1} parent=1 // pred_check_branch
      %47 = sbr.rel (0) target = $region17
    $region16: #{tpu_custom_call.1} parent=1 // pred_region
      %s49 = ssub.s32 2048, 2048
      %50 = vsyncadd [#allocation9], %s49
      %s51 = sshll.u32 [#allocation8], 4
      %s52 = int_to_ptr.vmem [resolvable:$true] %s51
      %57 = dma.hbm_to_vmem [thread:$0]  %s3, 2048, %s52, [#allocation9], 128, 128, 8
    $region17: #{tpu_custom_call.1} parent=1 // pred_fallthru
      _
    // Predicated region
    $region18: #{tpu_custom_call.1} parent=1 // pred_check
      _
    $region19: #{tpu_custom_call.1} parent=1 // pred_check_branch
      %59 = sbr.rel (0) target = $region21
    $region20: #{tpu_custom_call.1} parent=1 // pred_region
      %s61 = ssub.s32 2048, 2048
      %62 = vsyncadd [#allocation9], %s61
      %s63 = sshll.u32 [#allocation10], 4
      %s64 = int_to_ptr.vmem [resolvable:$true] %s63
      %69 = dma.hbm_to_vmem [thread:$0]  %s4, 2048, %s64, [#allocation9], 128, 128, 8
    $region21: #{tpu_custom_call.1} parent=1 // pred_fallthru
      _
    // Predicated region
    $region22: #{tpu_custom_call.1} parent=1 // pred_check
      _
    $region23: #{tpu_custom_call.1} parent=1 // pred_check_branch
      %71 = sbr.rel (0) target = $region25
    $region24: #{tpu_custom_call.1} parent=1 // pred_region
      %72 = dma.done [#allocation3], 128
    $region25: #{tpu_custom_call.1} parent=1 // pred_fallthru
      _
    // Predicated region
    $region26: #{tpu_custom_call.1} parent=1 // pred_check
      _
    $region27: #{tpu_custom_call.1} parent=1 // pred_check_branch
      %74 = sbr.rel (0) target = $region29
    $region28: #{tpu_custom_call.1} parent=1 // pred_region
      %75 = dma.done [#allocation6], 2048
    $region29: #{tpu_custom_call.1} parent=1 // pred_fallthru
      _
    // Predicated region
    $region30: #{tpu_custom_call.1} parent=1 // pred_check
      _
    $region31: #{tpu_custom_call.1} parent=1 // pred_check_branch
      %77 = sbr.rel (0) target = $region33
    $region32: #{tpu_custom_call.1} parent=1 // pred_region
      %78 = dma.done [#allocation6], 128
    $region33: #{tpu_custom_call.1} parent=1 // pred_fallthru
      _
    // Predicated region
    $region34: #{tpu_custom_call.1} parent=1 // pred_check
      _
    $region35: #{tpu_custom_call.1} parent=1 // pred_check_branch
      %80 = sbr.rel (0) target = $region37
    $region36: #{tpu_custom_call.1} parent=1 // pred_region
      %81 = dma.done [#allocation9], 2048
    $region37: #{tpu_custom_call.1} parent=1 // pred_fallthru
      _
    // Predicated region
    $region38: #{tpu_custom_call.1} parent=1 // pred_check
      _
    $region39: #{tpu_custom_call.1} parent=1 // pred_check_branch
      %83 = sbr.rel (0) target = $region41
    $region40: #{tpu_custom_call.1} parent=1 // pred_region
      %84 = dma.done [#allocation9], 2048
    $region41: #{tpu_custom_call.1} parent=1 // pred_fallthru
      _
    %v85 = vld [vmem:[#allocation10] sm:$0xff]
    %v86 = vld [vmem:[#allocation10 + $0x8] sm:$0xff]
    %v87 = vld [vmem:[#allocation10 + $0x10] sm:$0xff]
    %v88 = vld [vmem:[#allocation10 + $0x18] sm:$0xff]
    %v89 = vld [vmem:[#allocation10 + $0x20] sm:$0xff]
    %v90 = vld [vmem:[#allocation10 + $0x28] sm:$0xff]
    %v91 = vld [vmem:[#allocation10 + $0x30] sm:$0xff]
    %v92 = vld [vmem:[#allocation10 + $0x38] sm:$0xff]
    %v93 = vld [vmem:[#allocation10 + $0x40] sm:$0xff]
    %v94 = vld [vmem:[#allocation10 + $0x48] sm:$0xff]
    %v95 = vld [vmem:[#allocation10 + $0x50] sm:$0xff]
    %v96 = vld [vmem:[#allocation10 + $0x58] sm:$0xff]
    %v97 = vld [vmem:[#allocation10 + $0x60] sm:$0xff]
    %v98 = vld [vmem:[#allocation10 + $0x68] sm:$0xff]
    %v99 = vld [vmem:[#allocation10 + $0x70] sm:$0xff]
    %v100 = vld [vmem:[#allocation10 + $0x78] sm:$0xff]
    %v101 = vld [vmem:[#allocation8] sm:$0xff]
    %v102 = vld [vmem:[#allocation8 + $0x8] sm:$0xff]
    %v103 = vld [vmem:[#allocation8 + $0x10] sm:$0xff]
    %v104 = vld [vmem:[#allocation8 + $0x18] sm:$0xff]
    %v105 = vld [vmem:[#allocation8 + $0x20] sm:$0xff]
    %v106 = vld [vmem:[#allocation8 + $0x28] sm:$0xff]
    %v107 = vld [vmem:[#allocation8 + $0x30] sm:$0xff]
    %v108 = vld [vmem:[#allocation8 + $0x38] sm:$0xff]
    %v109 = vld [vmem:[#allocation8 + $0x40] sm:$0xff]
    %v110 = vld [vmem:[#allocation8 + $0x48] sm:$0xff]
    %v111 = vld [vmem:[#allocation8 + $0x50] sm:$0xff]
    %v112 = vld [vmem:[#allocation8 + $0x58] sm:$0xff]
    %v113 = vld [vmem:[#allocation8 + $0x60] sm:$0xff]
    %v114 = vld [vmem:[#allocation8 + $0x68] sm:$0xff]
    %v115 = vld [vmem:[#allocation8 + $0x70] sm:$0xff]
    %v116 = vld [vmem:[#allocation8 + $0x78] sm:$0xff]
    %v117 = vld [vmem:[#allocation5] sm:$0xff]
    %v118 = vld [vmem:[#allocation5 + $0x8] sm:$0xff]
    %v119 = vld [vmem:[#allocation5 + $0x10] sm:$0xff]
    %v120 = vld [vmem:[#allocation5 + $0x18] sm:$0xff]
    %v121 = vld [vmem:[#allocation5 + $0x20] sm:$0xff]
    %v122 = vld [vmem:[#allocation5 + $0x28] sm:$0xff]
    %v123 = vld [vmem:[#allocation5 + $0x30] sm:$0xff]
    %v124 = vld [vmem:[#allocation5 + $0x38] sm:$0xff]
    %v125 = vld [vmem:[#allocation5 + $0x40] sm:$0xff]
    %v126 = vld [vmem:[#allocation5 + $0x48] sm:$0xff]
    %v127 = vld [vmem:[#allocation5 + $0x50] sm:$0xff]
    %v128 = vld [vmem:[#allocation5 + $0x58] sm:$0xff]
    %v129 = vld [vmem:[#allocation5 + $0x60] sm:$0xff]
    %v130 = vld [vmem:[#allocation5 + $0x68] sm:$0xff]
    %v131 = vld [vmem:[#allocation5 + $0x70] sm:$0xff]
    %v132 = vld [vmem:[#allocation5 + $0x78] sm:$0xff]
    %133 = vmatprep.subr.mxu0 0.0
    %134 = vmatpush1.msra.mxu0 %v85
    %135 = vmatprep.subr.mxu0 0.0
    %136 = vmatpush1.msra.mxu0 %v86
    %137 = vmatprep.subr.mxu0 0.0
    %138 = vmatpush1.msra.mxu0 %v87
    %139 = vmatprep.subr.mxu0 0.0
    %140 = vmatpush1.msra.mxu0 %v88
    %141 = vmatprep.subr.mxu0 0.0
    %142 = vmatpush1.msra.mxu0 %v89
    %143 = vmatprep.subr.mxu0 0.0
    %144 = vmatpush1.msra.mxu0 %v90
    %145 = vmatprep.subr.mxu0 0.0
    %146 = vmatpush1.msra.mxu0 %v91
    %147 = vmatprep.subr.mxu0 0.0
    %148 = vmatpush1.msra.mxu0 %v92
    %149 = vmatprep.subr.mxu0 0.0
    %150 = vmatpush1.msra.mxu0 %v93
    %151 = vmatprep.subr.mxu0 0.0
    %152 = vmatpush1.msra.mxu0 %v94
    %153 = vmatprep.subr.mxu0 0.0
    %154 = vmatpush1.msra.mxu0 %v95
    %155 = vmatprep.subr.mxu0 0.0
    %156 = vmatpush1.msra.mxu0 %v96
    %157 = vmatprep.subr.mxu0 0.0
    %158 = vmatpush1.msra.mxu0 %v97
    %159 = vmatprep.subr.mxu0 0.0
    %160 = vmatpush1.msra.mxu0 %v98
    %161 = vmatprep.subr.mxu0 0.0
    %162 = vmatpush1.msra.mxu0 %v99
    %163 = vmatprep.subr.mxu0 0.0
    %164 = vmatpush1.msra.mxu0 %v100
    %165 = vmatprep.subr.mxu0 0.0
    %166 = vmatpush1.msra.mxu0 0.0
    %167 = vmatprep.subr.mxu0 0.0
    %168 = vmatpush1.msra.mxu0 0.0
    %169 = vmatprep.subr.mxu0 0.0
    %170 = vmatpush1.msra.mxu0 0.0
    %171 = vmatprep.subr.mxu0 0.0
    %172 = vmatpush1.msra.mxu0 0.0
    %173 = vmatprep.subr.mxu0 0.0
    %174 = vmatpush1.msra.mxu0 0.0
    %175 = vmatprep.subr.mxu0 0.0
    %176 = vmatpush1.msra.mxu0 0.0
    %177 = vmatprep.subr.mxu0 0.0
    %178 = vmatpush1.msra.mxu0 0.0
    %179 = vmatprep.subr.mxu0 0.0
    %180 = vmatpush1.msra.mxu0 0.0
    %181 = vmatprep.subr.mxu0 0.0
    %182 = vmatpush1.msra.mxu0 0.0
    %183 = vmatprep.subr.mxu0 0.0
    %184 = vmatpush1.msra.mxu0 0.0
    %185 = vmatprep.subr.mxu0 0.0
    %186 = vmatpush1.msra.mxu0 0.0
    %187 = vmatprep.subr.mxu0 0.0
    %188 = vmatpush1.msra.mxu0 0.0
    %189 = vmatprep.subr.mxu0 0.0
    %190 = vmatpush1.msra.mxu0 0.0
    %191 = vmatprep.subr.mxu0 0.0
    %192 = vmatpush1.msra.mxu0 0.0
    %193 = vmatprep.subr.mxu0 0.0
    %194 = vmatpush1.msra.mxu0 0.0
    %195 = vmatprep.subr.mxu0 0.0
    %196 = vmatpush1.msra.mxu0 0.0
    %197 = vmatprep.mubr.f32.mxu0 0.0
    %198 = vmatmul.mubr.f32.gmra.mrb[0].mxu0 %v117
    %v199 = vpop.f32.mrb[0].mxu0
    %v200 = vadd.f32 0.0, %v199
    %v201 = vpop.f32.mrb[0].mxu0
    %202 = vmatprep.mubr.f32.mxu0 0.0
    %203 = vmatmul.mubr.f32.gmra.mrb[0].mxu0 %v118
    %v204 = vpop.f32.mrb[0].mxu0
    %v205 = vadd.f32 0.0, %v204
    %v206 = vpop.f32.mrb[0].mxu0
    %207 = vmatprep.mubr.f32.mxu0 0.0
    %208 = vmatmul.mubr.f32.gmra.mrb[0].mxu0 %v119
    %v209 = vpop.f32.mrb[0].mxu0
    %v210 = vadd.f32 0.0, %v209
    %v211 = vpop.f32.mrb[0].mxu0
    %212 = vmatprep.mubr.f32.mxu0 0.0
    %213 = vmatmul.mubr.f32.gmra.mrb[0].mxu0 %v120
    %v214 = vpop.f32.mrb[0].mxu0
    %v215 = vadd.f32 0.0, %v214
    %v216 = vpop.f32.mrb[0].mxu0
    %217 = vmatprep.mubr.f32.mxu0 0.0
    %218 = vmatmul.mubr.f32.gmra.mrb[0].mxu0 %v121
    %v219 = vpop.f32.mrb[0].mxu0
    %v220 = vadd.f32 0.0, %v219
    %v221 = vpop.f32.mrb[0].mxu0
    %222 = vmatprep.mubr.f32.mxu0 0.0
    %223 = vmatmul.mubr.f32.gmra.mrb[0].mxu0 %v122
    %v224 = vpop.f32.mrb[0].mxu0
    %v225 = vadd.f32 0.0, %v224
    %v226 = vpop.f32.mrb[0].mxu0
    %227 = vmatprep.mubr.f32.mxu0 0.0
    %228 = vmatmul.mubr.f32.gmra.mrb[0].mxu0 %v123
    %v229 = vpop.f32.mrb[0].mxu0
    %v230 = vadd.f32 0.0, %v229
    %v231 = vpop.f32.mrb[0].mxu0
    %232 = vmatprep.mubr.f32.mxu0 0.0
    %233 = vmatmul.mubr.f32.gmra.mrb[0].mxu0 %v124
    %v234 = vpop.f32.mrb[0].mxu0
    %v235 = vadd.f32 0.0, %v234
    %v236 = vpop.f32.mrb[0].mxu0
    %237 = vmatprep.mubr.f32.mxu0 0.0
    %238 = vmatmul.mubr.f32.gmra.mrb[0].mxu0 %v125
    %v239 = vpop.f32.mrb[0].mxu0
    %v240 = vadd.f32 0.0, %v239
    %v241 = vpop.f32.mrb[0].mxu0
    %242 = vmatprep.mubr.f32.mxu0 0.0
    %243 = vmatmul.mubr.f32.gmra.mrb[0].mxu0 %v126
    %v244 = vpop.f32.mrb[0].mxu0
    %v245 = vadd.f32 0.0, %v244
    %v246 = vpop.f32.mrb[0].mxu0
    %247 = vmatprep.mubr.f32.mxu0 0.0
    %248 = vmatmul.mubr.f32.gmra.mrb[0].mxu0 %v127
    %v249 = vpop.f32.mrb[0].mxu0
    %v250 = vadd.f32 0.0, %v249
    %v251 = vpop.f32.mrb[0].mxu0
    %252 = vmatprep.mubr.f32.mxu0 0.0
    %253 = vmatmul.mubr.f32.gmra.mrb[0].mxu0 %v128
    %v254 = vpop.f32.mrb[0].mxu0
    %v255 = vadd.f32 0.0, %v254
    %v256 = vpop.f32.mrb[0].mxu0
    %257 = vmatprep.mubr.f32.mxu0 0.0
    %258 = vmatmul.mubr.f32.gmra.mrb[0].mxu0 %v129
    %v259 = vpop.f32.mrb[0].mxu0
    %v260 = vadd.f32 0.0, %v259
    %v261 = vpop.f32.mrb[0].mxu0
    %262 = vmatprep.mubr.f32.mxu0 0.0
    %263 = vmatmul.mubr.f32.gmra.mrb[0].mxu0 %v130
    %v264 = vpop.f32.mrb[0].mxu0
    %v265 = vadd.f32 0.0, %v264
    %v266 = vpop.f32.mrb[0].mxu0
    %267 = vmatprep.mubr.f32.mxu0 0.0
    %268 = vmatmul.mubr.f32.gmra.mrb[0].mxu0 %v131
    %v269 = vpop.f32.mrb[0].mxu0
    %v270 = vadd.f32 0.0, %v269
    %v271 = vpop.f32.mrb[0].mxu0
    %272 = vmatprep.mubr.f32.mxu0 0.0
    %273 = vmatmul.mubr.f32.gmra.mrb[0].mxu0 %v132
    %v274 = vpop.f32.mrb[0].mxu0
    %v275 = vadd.f32 0.0, %v274
    %v276 = vpop.f32.mrb[0].mxu0
    %277 = vdwg.mxu0
    %v278 = vadd.f32 %v101, %v200
    %v279 = vadd.f32 %v102, %v205
    %v280 = vadd.f32 %v103, %v210
    %v281 = vadd.f32 %v104, %v215
    %v282 = vadd.f32 %v105, %v220
    %v283 = vadd.f32 %v106, %v225
    %v284 = vadd.f32 %v107, %v230
    %v285 = vadd.f32 %v108, %v235
    %v286 = vadd.f32 %v109, %v240
    %v287 = vadd.f32 %v110, %v245
    %v288 = vadd.f32 %v111, %v250
    %v289 = vadd.f32 %v112, %v255
    %v290 = vadd.f32 %v113, %v260
    %v291 = vadd.f32 %v114, %v265
    %v292 = vadd.f32 %v115, %v270
    %v293 = vadd.f32 %v116, %v275
    %v294 = vld [vmem:[#allocation7] sm:$0xff]
    %295 = vmatprep.subr.mxu0 0.0
    %296 = vmatpush1.msra.mxu0 %v85
    %297 = vmatprep.subr.mxu0 0.0
    %298 = vmatpush1.msra.mxu0 %v86
    %299 = vmatprep.subr.mxu0 0.0
    %300 = vmatpush1.msra.mxu0 %v87
    %301 = vmatprep.subr.mxu0 0.0
    %302 = vmatpush1.msra.mxu0 %v88
    %303 = vmatprep.subr.mxu0 0.0
    %304 = vmatpush1.msra.mxu0 %v89
    %305 = vmatprep.subr.mxu0 0.0
    %306 = vmatpush1.msra.mxu0 %v90
    %307 = vmatprep.subr.mxu0 0.0
    %308 = vmatpush1.msra.mxu0 %v91
    %309 = vmatprep.subr.mxu0 0.0
    %310 = vmatpush1.msra.mxu0 %v92
    %311 = vmatprep.subr.mxu0 0.0
    %312 = vmatpush1.msra.mxu0 %v93
    %313 = vmatprep.subr.mxu0 0.0
    %314 = vmatpush1.msra.mxu0 %v94
    %315 = vmatprep.subr.mxu0 0.0
    %316 = vmatpush1.msra.mxu0 %v95
    %317 = vmatprep.subr.mxu0 0.0
    %318 = vmatpush1.msra.mxu0 %v96
    %319 = vmatprep.subr.mxu0 0.0
    %320 = vmatpush1.msra.mxu0 %v97
    %321 = vmatprep.subr.mxu0 0.0
    %322 = vmatpush1.msra.mxu0 %v98
    %323 = vmatprep.subr.mxu0 0.0
    %324 = vmatpush1.msra.mxu0 %v99
    %325 = vmatprep.subr.mxu0 0.0
    %326 = vmatpush1.msra.mxu0 %v100
    %327 = vmatprep.subr.mxu0 0.0
    %328 = vmatpush1.msra.mxu0 0.0
    %329 = vmatprep.subr.mxu0 0.0
    %330 = vmatpush1.msra.mxu0 0.0
    %331 = vmatprep.subr.mxu0 0.0
    %332 = vmatpush1.msra.mxu0 0.0
    %333 = vmatprep.subr.mxu0 0.0
    %334 = vmatpush1.msra.mxu0 0.0
    %335 = vmatprep.subr.mxu0 0.0
    %336 = vmatpush1.msra.mxu0 0.0
    %337 = vmatprep.subr.mxu0 0.0
    %338 = vmatpush1.msra.mxu0 0.0
    %339 = vmatprep.subr.mxu0 0.0
    %340 = vmatpush1.msra.mxu0 0.0
    %341 = vmatprep.subr.mxu0 0.0
    %342 = vmatpush1.msra.mxu0 0.0
    %343 = vmatprep.subr.mxu0 0.0
    %344 = vmatpush1.msra.mxu0 0.0
    %345 = vmatprep.subr.mxu0 0.0
    %346 = vmatpush1.msra.mxu0 0.0
    %347 = vmatprep.subr.mxu0 0.0
    %348 = vmatpush1.msra.mxu0 0.0
    %349 = vmatprep.subr.mxu0 0.0
    %350 = vmatpush1.msra.mxu0 0.0
    %351 = vmatprep.subr.mxu0 0.0
    %352 = vmatpush1.msra.mxu0 0.0
    %353 = vmatprep.subr.mxu0 0.0
    %354 = vmatpush1.msra.mxu0 0.0
    %355 = vmatprep.subr.mxu0 0.0
    %356 = vmatpush1.msra.mxu0 0.0
    %357 = vmatprep.subr.mxu0 0.0
    %358 = vmatpush1.msra.mxu0 0.0
    %359 = vmatprep.mubr.f32.mxu0 0.0
    %360 = vmatmul.mubr.f32.gmra.mrb[0].mxu0 %v294
    %v361 = vpop.f32.mrb[0].mxu0
    %v362 = vadd.f32 0.0, %v361
    %v363 = vpop.f32.mrb[0].mxu0
    %364 = vdwg.mxu0
    %v365 = vlaneseq
    %v366 = vshrl.u32 %v365, 7
    %v367 = vadd.s32 %v366, 8
    %v368 = vadd.s32 %v366, 16
    %v369 = vadd.s32 %v366, 24
    %v370 = vadd.s32 %v366, 32
    %v371 = vadd.s32 %v366, 40
    %v372 = vadd.s32 %v366, 48
    %v373 = vadd.s32 %v366, 56
    %v374 = vadd.s32 %v366, 64
    %v375 = vadd.s32 %v366, 72
    %v376 = vadd.s32 %v366, 80
    %v377 = vadd.s32 %v366, 88
    %v378 = vadd.s32 %v366, 96
    %v379 = vadd.s32 %v366, 104
    %v380 = vadd.s32 %v366, 112
    %v381 = vadd.s32 %v366, 120
    %v382 = vlaneseq
    %v383 = vand.u32 %v382, 127
    %vm384 = vcmp.eq.s32.totalorder %v366, %v383
    %vm385 = vcmp.eq.s32.totalorder %v367, %v383
    %vm386 = vcmp.eq.s32.totalorder %v368, %v383
    %vm387 = vcmp.eq.s32.totalorder %v369, %v383
    %vm388 = vcmp.eq.s32.totalorder %v370, %v383
    %vm389 = vcmp.eq.s32.totalorder %v371, %v383
    %vm390 = vcmp.eq.s32.totalorder %v372, %v383
    %vm391 = vcmp.eq.s32.totalorder %v373, %v383
    %vm392 = vcmp.eq.s32.totalorder %v374, %v383
    %vm393 = vcmp.eq.s32.totalorder %v375, %v383
    %vm394 = vcmp.eq.s32.totalorder %v376, %v383
    %vm395 = vcmp.eq.s32.totalorder %v377, %v383
    %vm396 = vcmp.eq.s32.totalorder %v378, %v383
    %vm397 = vcmp.eq.s32.totalorder %v379, %v383
    %vm398 = vcmp.eq.s32.totalorder %v380, %v383
    %vm399 = vcmp.eq.s32.totalorder %v381, %v383
    %v400 = vsel %vm384, 1.0, 0.0
    %v401 = vsel %vm385, 1.0, 0.0
    %v402 = vsel %vm386, 1.0, 0.0
    %v403 = vsel %vm387, 1.0, 0.0
    %v404 = vsel %vm388, 1.0, 0.0
    %v405 = vsel %vm389, 1.0, 0.0
    %v406 = vsel %vm390, 1.0, 0.0
    %v407 = vsel %vm391, 1.0, 0.0
    %v408 = vsel %vm392, 1.0, 0.0
    %v409 = vsel %vm393, 1.0, 0.0
    %v410 = vsel %vm394, 1.0, 0.0
    %v411 = vsel %vm395, 1.0, 0.0
    %v412 = vsel %vm396, 1.0, 0.0
    %v413 = vsel %vm397, 1.0, 0.0
    %v414 = vsel %vm398, 1.0, 0.0
    %v415 = vsel %vm399, 1.0, 0.0
    %416 = vmatprep.subr.mxu0 0.0
    %417 = vmatpush1.msra.mxu0 %v278
    %418 = vmatprep.subr.mxu0 0.0
    %419 = vmatpush1.msra.mxu0 %v279
    %420 = vmatprep.subr.mxu0 0.0
    %421 = vmatpush1.msra.mxu0 %v280
    %422 = vmatprep.subr.mxu0 0.0
    %423 = vmatpush1.msra.mxu0 %v281
    %424 = vmatprep.subr.mxu0 0.0
    %425 = vmatpush1.msra.mxu0 %v282
    %426 = vmatprep.subr.mxu0 0.0
    %427 = vmatpush1.msra.mxu0 %v283
    %428 = vmatprep.subr.mxu0 0.0
    %429 = vmatpush1.msra.mxu0 %v284
    %430 = vmatprep.subr.mxu0 0.0
    %431 = vmatpush1.msra.mxu0 %v285
    %432 = vmatprep.subr.mxu0 0.0
    %433 = vmatpush1.msra.mxu0 %v286
    %434 = vmatprep.subr.mxu0 0.0
    %435 = vmatpush1.msra.mxu0 %v287
    %436 = vmatprep.subr.mxu0 0.0
    %437 = vmatpush1.msra.mxu0 %v288
    %438 = vmatprep.subr.mxu0 0.0
    %439 = vmatpush1.msra.mxu0 %v289
    %440 = vmatprep.subr.mxu0 0.0
    %441 = vmatpush1.msra.mxu0 %v290
    %442 = vmatprep.subr.mxu0 0.0
    %443 = vmatpush1.msra.mxu0 %v291
    %444 = vmatprep.subr.mxu0 0.0
    %445 = vmatpush1.msra.mxu0 %v292
    %446 = vmatprep.subr.mxu0 0.0
    %447 = vmatpush1.msra.mxu0 %v293
    %448 = vmatprep.subr.mxu0 0.0
    %449 = vmatpush1.msra.mxu0 0.0
    %450 = vmatprep.subr.mxu0 0.0
    %451 = vmatpush1.msra.mxu0 0.0
    %452 = vmatprep.subr.mxu0 0.0
    %453 = vmatpush1.msra.mxu0 0.0
    %454 = vmatprep.subr.mxu0 0.0
    %455 = vmatpush1.msra.mxu0 0.0
    %456 = vmatprep.subr.mxu0 0.0
    %457 = vmatpush1.msra.mxu0 0.0
    %458 = vmatprep.subr.mxu0 0.0
    %459 = vmatpush1.msra.mxu0 0.0
    %460 = vmatprep.subr.mxu0 0.0
    %461 = vmatpush1.msra.mxu0 0.0
    %462 = vmatprep.subr.mxu0 0.0
    %463 = vmatpush1.msra.mxu0 0.0
    %464 = vmatprep.subr.mxu0 0.0
    %465 = vmatpush1.msra.mxu0 0.0
    %466 = vmatprep.subr.mxu0 0.0
    %467 = vmatpush1.msra.mxu0 0.0
    %468 = vmatprep.subr.mxu0 0.0
    %469 = vmatpush1.msra.mxu0 0.0
    %470 = vmatprep.subr.mxu0 0.0
    %471 = vmatpush1.msra.mxu0 0.0
    %472 = vmatprep.subr.mxu0 0.0
    %473 = vmatpush1.msra.mxu0 0.0
    %474 = vmatprep.subr.mxu0 0.0
    %475 = vmatpush1.msra.mxu0 0.0
    %476 = vmatprep.subr.mxu0 0.0
    %477 = vmatpush1.msra.mxu0 0.0
    %478 = vmatprep.subr.mxu0 0.0
    %479 = vmatpush1.msra.mxu0 0.0
    %480 = vmatprep.mubr.f32.mxu0 0.0
    %481 = vmatmul.mubr.f32.gmra.mrb[0].mxu0 %v400
    %v482 = vpop.f32.mrb[0].mxu0
    %v483 = vadd.f32 0.0, %v482
    %v484 = vpop.f32.mrb[0].mxu0
    %485 = vmatprep.mubr.f32.mxu0 0.0
    %486 = vmatmul.mubr.f32.gmra.mrb[0].mxu0 %v401
    %v487 = vpop.f32.mrb[0].mxu0
    %v488 = vadd.f32 0.0, %v487
    %v489 = vpop.f32.mrb[0].mxu0
    %490 = vmatprep.mubr.f32.mxu0 0.0
    %491 = vmatmul.mubr.f32.gmra.mrb[0].mxu0 %v402
    %v492 = vpop.f32.mrb[0].mxu0
    %v493 = vadd.f32 0.0, %v492
    %v494 = vpop.f32.mrb[0].mxu0
    %495 = vmatprep.mubr.f32.mxu0 0.0
    %496 = vmatmul.mubr.f32.gmra.mrb[0].mxu0 %v403
    %v497 = vpop.f32.mrb[0].mxu0
    %v498 = vadd.f32 0.0, %v497
    %v499 = vpop.f32.mrb[0].mxu0
    %500 = vmatprep.mubr.f32.mxu0 0.0
    %501 = vmatmul.mubr.f32.gmra.mrb[0].mxu0 %v404
    %v502 = vpop.f32.mrb[0].mxu0
    %v503 = vadd.f32 0.0, %v502
    %v504 = vpop.f32.mrb[0].mxu0
    %505 = vmatprep.mubr.f32.mxu0 0.0
    %506 = vmatmul.mubr.f32.gmra.mrb[0].mxu0 %v405
    %v507 = vpop.f32.mrb[0].mxu0
    %v508 = vadd.f32 0.0, %v507
    %v509 = vpop.f32.mrb[0].mxu0
    %510 = vmatprep.mubr.f32.mxu0 0.0
    %511 = vmatmul.mubr.f32.gmra.mrb[0].mxu0 %v406
    %v512 = vpop.f32.mrb[0].mxu0
    %v513 = vadd.f32 0.0, %v512
    %v514 = vpop.f32.mrb[0].mxu0
    %515 = vmatprep.mubr.f32.mxu0 0.0
    %516 = vmatmul.mubr.f32.gmra.mrb[0].mxu0 %v407
    %v517 = vpop.f32.mrb[0].mxu0
    %v518 = vadd.f32 0.0, %v517
    %v519 = vpop.f32.mrb[0].mxu0
    %520 = vmatprep.mubr.f32.mxu0 0.0
    %521 = vmatmul.mubr.f32.gmra.mrb[0].mxu0 %v408
    %v522 = vpop.f32.mrb[0].mxu0
    %v523 = vadd.f32 0.0, %v522
    %v524 = vpop.f32.mrb[0].mxu0
    %525 = vmatprep.mubr.f32.mxu0 0.0
    %526 = vmatmul.mubr.f32.gmra.mrb[0].mxu0 %v409
    %v527 = vpop.f32.mrb[0].mxu0
    %v528 = vadd.f32 0.0, %v527
    %v529 = vpop.f32.mrb[0].mxu0
    %530 = vmatprep.mubr.f32.mxu0 0.0
    %531 = vmatmul.mubr.f32.gmra.mrb[0].mxu0 %v410
    %v532 = vpop.f32.mrb[0].mxu0
    %v533 = vadd.f32 0.0, %v532
    %v534 = vpop.f32.mrb[0].mxu0
    %535 = vmatprep.mubr.f32.mxu0 0.0
    %536 = vmatmul.mubr.f32.gmra.mrb[0].mxu0 %v411
    %v537 = vpop.f32.mrb[0].mxu0
    %v538 = vadd.f32 0.0, %v537
    %v539 = vpop.f32.mrb[0].mxu0
    %540 = vmatprep.mubr.f32.mxu0 0.0
    %541 = vmatmul.mubr.f32.gmra.mrb[0].mxu0 %v412
    %v542 = vpop.f32.mrb[0].mxu0
    %v543 = vadd.f32 0.0, %v542
    %v544 = vpop.f32.mrb[0].mxu0
    %545 = vmatprep.mubr.f32.mxu0 0.0
    %546 = vmatmul.mubr.f32.gmra.mrb[0].mxu0 %v413
    %v547 = vpop.f32.mrb[0].mxu0
    %v548 = vadd.f32 0.0, %v547
    %v549 = vpop.f32.mrb[0].mxu0
    %550 = vmatprep.mubr.f32.mxu0 0.0
    %551 = vmatmul.mubr.f32.gmra.mrb[0].mxu0 %v414
    %v552 = vpop.f32.mrb[0].mxu0
    %v553 = vadd.f32 0.0, %v552
    %v554 = vpop.f32.mrb[0].mxu0
    %555 = vmatprep.mubr.f32.mxu0 0.0
    %556 = vmatmul.mubr.f32.gmra.mrb[0].mxu0 %v415
    %v557 = vpop.f32.mrb[0].mxu0
    %v558 = vadd.f32 0.0, %v557
    %v559 = vpop.f32.mrb[0].mxu0
    %560 = vdwg.mxu0
    %v561 = vadd.f32 %v400, %v483
    %v562 = vadd.f32 %v401, %v488
    %v563 = vadd.f32 %v402, %v493
    %v564 = vadd.f32 %v403, %v498
    %v565 = vadd.f32 %v404, %v503
    %v566 = vadd.f32 %v405, %v508
    %v567 = vadd.f32 %v406, %v513
    %v568 = vadd.f32 %v407, %v518
    %v569 = vadd.f32 %v408, %v523
    %v570 = vadd.f32 %v409, %v528
    %v571 = vadd.f32 %v410, %v533
    %v572 = vadd.f32 %v411, %v538
    %v573 = vadd.f32 %v412, %v543
    %v574 = vadd.f32 %v413, %v548
    %v575 = vadd.f32 %v414, %v553
    %v576 = vadd.f32 %v415, %v558
    %577 = vmatprep.subr.mxu0 0.0
    %578 = vmatpush1.msra.mxu0 %v278
    %579 = vmatprep.subr.mxu0 0.0
    %580 = vmatpush1.msra.mxu0 %v279
    %581 = vmatprep.subr.mxu0 0.0
    %582 = vmatpush1.msra.mxu0 %v280
    %583 = vmatprep.subr.mxu0 0.0
    %584 = vmatpush1.msra.mxu0 %v281
    %585 = vmatprep.subr.mxu0 0.0
    %586 = vmatpush1.msra.mxu0 %v282
    %587 = vmatprep.subr.mxu0 0.0
    %588 = vmatpush1.msra.mxu0 %v283
    %589 = vmatprep.subr.mxu0 0.0
    %590 = vmatpush1.msra.mxu0 %v284
    %591 = vmatprep.subr.mxu0 0.0
    %592 = vmatpush1.msra.mxu0 %v285
    %593 = vmatprep.subr.mxu0 0.0
    %594 = vmatpush1.msra.mxu0 %v286
    %595 = vmatprep.subr.mxu0 0.0
    %596 = vmatpush1.msra.mxu0 %v287
    %597 = vmatprep.subr.mxu0 0.0
    %598 = vmatpush1.msra.mxu0 %v288
    %599 = vmatprep.subr.mxu0 0.0
    %600 = vmatpush1.msra.mxu0 %v289
    %601 = vmatprep.subr.mxu0 0.0
    %602 = vmatpush1.msra.mxu0 %v290
    %603 = vmatprep.subr.mxu0 0.0
    %604 = vmatpush1.msra.mxu0 %v291
    %605 = vmatprep.subr.mxu0 0.0
    %606 = vmatpush1.msra.mxu0 %v292
    %607 = vmatprep.subr.mxu0 0.0
    %608 = vmatpush1.msra.mxu0 %v293
    %609 = vmatprep.subr.mxu0 0.0
    %610 = vmatpush1.msra.mxu0 0.0
    %611 = vmatprep.subr.mxu0 0.0
    %612 = vmatpush1.msra.mxu0 0.0
    %613 = vmatprep.subr.mxu0 0.0
    %614 = vmatpush1.msra.mxu0 0.0
    %615 = vmatprep.subr.mxu0 0.0
    %616 = vmatpush1.msra.mxu0 0.0
    %617 = vmatprep.subr.mxu0 0.0
    %618 = vmatpush1.msra.mxu0 0.0
    %619 = vmatprep.subr.mxu0 0.0
    %620 = vmatpush1.msra.mxu0 0.0
    %621 = vmatprep.subr.mxu0 0.0
    %622 = vmatpush1.msra.mxu0 0.0
    %623 = vmatprep.subr.mxu0 0.0
    %624 = vmatpush1.msra.mxu0 0.0
    %625 = vmatprep.subr.mxu0 0.0
    %626 = vmatpush1.msra.mxu0 0.0
    %627 = vmatprep.subr.mxu0 0.0
    %628 = vmatpush1.msra.mxu0 0.0
    %629 = vmatprep.subr.mxu0 0.0
    %630 = vmatpush1.msra.mxu0 0.0
    %631 = vmatprep.subr.mxu0 0.0
    %632 = vmatpush1.msra.mxu0 0.0
    %633 = vmatprep.subr.mxu0 0.0
    %634 = vmatpush1.msra.mxu0 0.0
    %635 = vmatprep.subr.mxu0 0.0
    %636 = vmatpush1.msra.mxu0 0.0
    %637 = vmatprep.subr.mxu0 0.0
    %638 = vmatpush1.msra.mxu0 0.0
    %639 = vmatprep.subr.mxu0 0.0
    %640 = vmatpush1.msra.mxu0 0.0
    %641 = vmatprep.mubr.f32.mxu0 0.0
    %642 = vmatmul.mubr.f32.gmra.mrb[0].mxu0 %v278
    %v643 = vpop.f32.mrb[0].mxu0
    %v644 = vadd.f32 0.0, %v643
    %v645 = vpop.f32.mrb[0].mxu0
    %646 = vmatprep.mubr.f32.mxu0 0.0
    %647 = vmatmul.mubr.f32.gmra.mrb[0].mxu0 %v279
    %v648 = vpop.f32.mrb[0].mxu0
    %v649 = vadd.f32 0.0, %v648
    %v650 = vpop.f32.mrb[0].mxu0
    %651 = vmatprep.mubr.f32.mxu0 0.0
    %652 = vmatmul.mubr.f32.gmra.mrb[0].mxu0 %v280
    %v653 = vpop.f32.mrb[0].mxu0
    %v654 = vadd.f32 0.0, %v653
    %v655 = vpop.f32.mrb[0].mxu0
    %656 = vmatprep.mubr.f32.mxu0 0.0
    %657 = vmatmul.mubr.f32.gmra.mrb[0].mxu0 %v281
    %v658 = vpop.f32.mrb[0].mxu0
    %v659 = vadd.f32 0.0, %v658
    %v660 = vpop.f32.mrb[0].mxu0
    %661 = vmatprep.mubr.f32.mxu0 0.0
    %662 = vmatmul.mubr.f32.gmra.mrb[0].mxu0 %v282
    %v663 = vpop.f32.mrb[0].mxu0
    %v664 = vadd.f32 0.0, %v663
    %v665 = vpop.f32.mrb[0].mxu0
    %666 = vmatprep.mubr.f32.mxu0 0.0
    %667 = vmatmul.mubr.f32.gmra.mrb[0].mxu0 %v283
    %v668 = vpop.f32.mrb[0].mxu0
    %v669 = vadd.f32 0.0, %v668
    %v670 = vpop.f32.mrb[0].mxu0
    %671 = vmatprep.mubr.f32.mxu0 0.0
    %672 = vmatmul.mubr.f32.gmra.mrb[0].mxu0 %v284
    %v673 = vpop.f32.mrb[0].mxu0
    %v674 = vadd.f32 0.0, %v673
    %v675 = vpop.f32.mrb[0].mxu0
    %676 = vmatprep.mubr.f32.mxu0 0.0
    %677 = vmatmul.mubr.f32.gmra.mrb[0].mxu0 %v285
    %v678 = vpop.f32.mrb[0].mxu0
    %v679 = vadd.f32 0.0, %v678
    %v680 = vpop.f32.mrb[0].mxu0
    %681 = vmatprep.mubr.f32.mxu0 0.0
    %682 = vmatmul.mubr.f32.gmra.mrb[0].mxu0 %v286
    %v683 = vpop.f32.mrb[0].mxu0
    %v684 = vadd.f32 0.0, %v683
    %v685 = vpop.f32.mrb[0].mxu0
    %686 = vmatprep.mubr.f32.mxu0 0.0
    %687 = vmatmul.mubr.f32.gmra.mrb[0].mxu0 %v287
    %v688 = vpop.f32.mrb[0].mxu0
    %v689 = vadd.f32 0.0, %v688
    %v690 = vpop.f32.mrb[0].mxu0
    %691 = vmatprep.mubr.f32.mxu0 0.0
    %692 = vmatmul.mubr.f32.gmra.mrb[0].mxu0 %v288
    %v693 = vpop.f32.mrb[0].mxu0
    %v694 = vadd.f32 0.0, %v693
    %v695 = vpop.f32.mrb[0].mxu0
    %696 = vmatprep.mubr.f32.mxu0 0.0
    %697 = vmatmul.mubr.f32.gmra.mrb[0].mxu0 %v289
    %v698 = vpop.f32.mrb[0].mxu0
    %v699 = vadd.f32 0.0, %v698
    %v700 = vpop.f32.mrb[0].mxu0
    %701 = vmatprep.mubr.f32.mxu0 0.0
    %702 = vmatmul.mubr.f32.gmra.mrb[0].mxu0 %v290
    %v703 = vpop.f32.mrb[0].mxu0
    %v704 = vadd.f32 0.0, %v703
    %v705 = vpop.f32.mrb[0].mxu0
    %706 = vmatprep.mubr.f32.mxu0 0.0
    %707 = vmatmul.mubr.f32.gmra.mrb[0].mxu0 %v291
    %v708 = vpop.f32.mrb[0].mxu0
    %v709 = vadd.f32 0.0, %v708
    %v710 = vpop.f32.mrb[0].mxu0
    %711 = vmatprep.mubr.f32.mxu0 0.0
    %712 = vmatmul.mubr.f32.gmra.mrb[0].mxu0 %v292
    %v713 = vpop.f32.mrb[0].mxu0
    %v714 = vadd.f32 0.0, %v713
    %v715 = vpop.f32.mrb[0].mxu0
    %716 = vmatprep.mubr.f32.mxu0 0.0
    %717 = vmatmul.mubr.f32.gmra.mrb[0].mxu0 %v293
    %v718 = vpop.f32.mrb[0].mxu0
    %v719 = vadd.f32 0.0, %v718
    %v720 = vpop.f32.mrb[0].mxu0
    %721 = vdwg.mxu0
    %v722 = vadd.f32 %v561, %v644
    %v723 = vadd.f32 %v562, %v649
    %v724 = vadd.f32 %v563, %v654
    %v725 = vadd.f32 %v564, %v659
    %v726 = vadd.f32 %v565, %v664
    %v727 = vadd.f32 %v566, %v669
    %v728 = vadd.f32 %v567, %v674
    %v729 = vadd.f32 %v568, %v679
    %v730 = vadd.f32 %v569, %v684
    %v731 = vadd.f32 %v570, %v689
    %v732 = vadd.f32 %v571, %v694
    %v733 = vadd.f32 %v572, %v699
    %v734 = vadd.f32 %v573, %v704
    %v735 = vadd.f32 %v574, %v709
    %v736 = vadd.f32 %v575, %v714
    %v737 = vadd.f32 %v576, %v719
    %738 = vmatprep.subr.mxu0 0.0
    %739 = vmatpush1.msra.mxu0 %v278
    %740 = vmatprep.subr.mxu0 0.0
    %741 = vmatpush1.msra.mxu0 %v279
    %742 = vmatprep.subr.mxu0 0.0
    %743 = vmatpush1.msra.mxu0 %v280
    %744 = vmatprep.subr.mxu0 0.0
    %745 = vmatpush1.msra.mxu0 %v281
    %746 = vmatprep.subr.mxu0 0.0
    %747 = vmatpush1.msra.mxu0 %v282
    %748 = vmatprep.subr.mxu0 0.0
    %749 = vmatpush1.msra.mxu0 %v283
    %750 = vmatprep.subr.mxu0 0.0
    %751 = vmatpush1.msra.mxu0 %v284
    %752 = vmatprep.subr.mxu0 0.0
    %753 = vmatpush1.msra.mxu0 %v285
    %754 = vmatprep.subr.mxu0 0.0
    %755 = vmatpush1.msra.mxu0 %v286
    %756 = vmatprep.subr.mxu0 0.0
    %757 = vmatpush1.msra.mxu0 %v287
    %758 = vmatprep.subr.mxu0 0.0
    %759 = vmatpush1.msra.mxu0 %v288
    %760 = vmatprep.subr.mxu0 0.0
    %761 = vmatpush1.msra.mxu0 %v289
    %762 = vmatprep.subr.mxu0 0.0
    %763 = vmatpush1.msra.mxu0 %v290
    %764 = vmatprep.subr.mxu0 0.0
    %765 = vmatpush1.msra.mxu0 %v291
    %766 = vmatprep.subr.mxu0 0.0
    %767 = vmatpush1.msra.mxu0 %v292
    %768 = vmatprep.subr.mxu0 0.0
    %769 = vmatpush1.msra.mxu0 %v293
    %770 = vmatprep.subr.mxu0 0.0
    %771 = vmatpush1.msra.mxu0 0.0
    %772 = vmatprep.subr.mxu0 0.0
    %773 = vmatpush1.msra.mxu0 0.0
    %774 = vmatprep.subr.mxu0 0.0
    %775 = vmatpush1.msra.mxu0 0.0
    %776 = vmatprep.subr.mxu0 0.0
    %777 = vmatpush1.msra.mxu0 0.0
    %778 = vmatprep.subr.mxu0 0.0
    %779 = vmatpush1.msra.mxu0 0.0
    %780 = vmatprep.subr.mxu0 0.0
    %781 = vmatpush1.msra.mxu0 0.0
    %782 = vmatprep.subr.mxu0 0.0
    %783 = vmatpush1.msra.mxu0 0.0
    %784 = vmatprep.subr.mxu0 0.0
    %785 = vmatpush1.msra.mxu0 0.0
    %786 = vmatprep.subr.mxu0 0.0
    %787 = vmatpush1.msra.mxu0 0.0
    %788 = vmatprep.subr.mxu0 0.0
    %789 = vmatpush1.msra.mxu0 0.0
    %790 = vmatprep.subr.mxu0 0.0
    %791 = vmatpush1.msra.mxu0 0.0
    %792 = vmatprep.subr.mxu0 0.0
    %793 = vmatpush1.msra.mxu0 0.0
    %794 = vmatprep.subr.mxu0 0.0
    %795 = vmatpush1.msra.mxu0 0.0
    %796 = vmatprep.subr.mxu0 0.0
    %797 = vmatpush1.msra.mxu0 0.0
    %798 = vmatprep.subr.mxu0 0.0
    %799 = vmatpush1.msra.mxu0 0.0
    %800 = vmatprep.subr.mxu0 0.0
    %801 = vmatpush1.msra.mxu0 0.0
    %802 = vmatprep.mubr.f32.mxu0 0.0
    %803 = vmatmul.mubr.f32.gmra.mrb[0].mxu0 %v644
    %v804 = vpop.f32.mrb[0].mxu0
    %v805 = vadd.f32 0.0, %v804
    %v806 = vpop.f32.mrb[0].mxu0
    %807 = vmatprep.mubr.f32.mxu0 0.0
    %808 = vmatmul.mubr.f32.gmra.mrb[0].mxu0 %v649
    %v809 = vpop.f32.mrb[0].mxu0
    %v810 = vadd.f32 0.0, %v809
    %v811 = vpop.f32.mrb[0].mxu0
    %812 = vmatprep.mubr.f32.mxu0 0.0
    %813 = vmatmul.mubr.f32.gmra.mrb[0].mxu0 %v654
    %v814 = vpop.f32.mrb[0].mxu0
    %v815 = vadd.f32 0.0, %v814
    %v816 = vpop.f32.mrb[0].mxu0
    %817 = vmatprep.mubr.f32.mxu0 0.0
    %818 = vmatmul.mubr.f32.gmra.mrb[0].mxu0 %v659
    %v819 = vpop.f32.mrb[0].mxu0
    %v820 = vadd.f32 0.0, %v819
    %v821 = vpop.f32.mrb[0].mxu0
    %822 = vmatprep.mubr.f32.mxu0 0.0
    %823 = vmatmul.mubr.f32.gmra.mrb[0].mxu0 %v664
    %v824 = vpop.f32.mrb[0].mxu0
    %v825 = vadd.f32 0.0, %v824
    %v826 = vpop.f32.mrb[0].mxu0
    %827 = vmatprep.mubr.f32.mxu0 0.0
    %828 = vmatmul.mubr.f32.gmra.mrb[0].mxu0 %v669
    %v829 = vpop.f32.mrb[0].mxu0
    %v830 = vadd.f32 0.0, %v829
    %v831 = vpop.f32.mrb[0].mxu0
    %832 = vmatprep.mubr.f32.mxu0 0.0
    %833 = vmatmul.mubr.f32.gmra.mrb[0].mxu0 %v674
    %v834 = vpop.f32.mrb[0].mxu0
    %v835 = vadd.f32 0.0, %v834
    %v836 = vpop.f32.mrb[0].mxu0
    %837 = vmatprep.mubr.f32.mxu0 0.0
    %838 = vmatmul.mubr.f32.gmra.mrb[0].mxu0 %v679
    %v839 = vpop.f32.mrb[0].mxu0
    %v840 = vadd.f32 0.0, %v839
    %v841 = vpop.f32.mrb[0].mxu0
    %842 = vmatprep.mubr.f32.mxu0 0.0
    %843 = vmatmul.mubr.f32.gmra.mrb[0].mxu0 %v684
    %v844 = vpop.f32.mrb[0].mxu0
    %v845 = vadd.f32 0.0, %v844
    %v846 = vpop.f32.mrb[0].mxu0
    %847 = vmatprep.mubr.f32.mxu0 0.0
    %848 = vmatmul.mubr.f32.gmra.mrb[0].mxu0 %v689
    %v849 = vpop.f32.mrb[0].mxu0
    %v850 = vadd.f32 0.0, %v849
    %v851 = vpop.f32.mrb[0].mxu0
    %852 = vmatprep.mubr.f32.mxu0 0.0
    %853 = vmatmul.mubr.f32.gmra.mrb[0].mxu0 %v694
    %v854 = vpop.f32.mrb[0].mxu0
    %v855 = vadd.f32 0.0, %v854
    %v856 = vpop.f32.mrb[0].mxu0
    %857 = vmatprep.mubr.f32.mxu0 0.0
    %858 = vmatmul.mubr.f32.gmra.mrb[0].mxu0 %v699
    %v859 = vpop.f32.mrb[0].mxu0
    %v860 = vadd.f32 0.0, %v859
    %v861 = vpop.f32.mrb[0].mxu0
    %862 = vmatprep.mubr.f32.mxu0 0.0
    %863 = vmatmul.mubr.f32.gmra.mrb[0].mxu0 %v704
    %v864 = vpop.f32.mrb[0].mxu0
    %v865 = vadd.f32 0.0, %v864
    %v866 = vpop.f32.mrb[0].mxu0
    %867 = vmatprep.mubr.f32.mxu0 0.0
    %868 = vmatmul.mubr.f32.gmra.mrb[0].mxu0 %v709
    %v869 = vpop.f32.mrb[0].mxu0
    %v870 = vadd.f32 0.0, %v869
    %v871 = vpop.f32.mrb[0].mxu0
    %872 = vmatprep.mubr.f32.mxu0 0.0
    %873 = vmatmul.mubr.f32.gmra.mrb[0].mxu0 %v714
    %v874 = vpop.f32.mrb[0].mxu0
    %v875 = vadd.f32 0.0, %v874
    %v876 = vpop.f32.mrb[0].mxu0
    %877 = vmatprep.mubr.f32.mxu0 0.0
    %878 = vmatmul.mubr.f32.gmra.mrb[0].mxu0 %v719
    %v879 = vpop.f32.mrb[0].mxu0
    %v880 = vadd.f32 0.0, %v879
    %v881 = vpop.f32.mrb[0].mxu0
    %882 = vdwg.mxu0
    %883 = vmatprep.subr.mxu0 0.0
    %884 = vmatpush1.msra.mxu0 %v805
    %885 = vmatprep.subr.mxu0 0.0
    %886 = vmatpush1.msra.mxu0 %v810
    %887 = vmatprep.subr.mxu0 0.0
    %888 = vmatpush1.msra.mxu0 %v815
    %889 = vmatprep.subr.mxu0 0.0
    %890 = vmatpush1.msra.mxu0 %v820
    %891 = vmatprep.subr.mxu0 0.0
    %892 = vmatpush1.msra.mxu0 %v825
    %893 = vmatprep.subr.mxu0 0.0
    %894 = vmatpush1.msra.mxu0 %v830
    %895 = vmatprep.subr.mxu0 0.0
    %896 = vmatpush1.msra.mxu0 %v835
    %897 = vmatprep.subr.mxu0 0.0
    %898 = vmatpush1.msra.mxu0 %v840
    %899 = vmatprep.subr.mxu0 0.0
    %900 = vmatpush1.msra.mxu0 %v845
    %901 = vmatprep.subr.mxu0 0.0
    %902 = vmatpush1.msra.mxu0 %v850
    %903 = vmatprep.subr.mxu0 0.0
    %904 = vmatpush1.msra.mxu0 %v855
    %905 = vmatprep.subr.mxu0 0.0
    %906 = vmatpush1.msra.mxu0 %v860
    %907 = vmatprep.subr.mxu0 0.0
    %908 = vmatpush1.msra.mxu0 %v865
    %909 = vmatprep.subr.mxu0 0.0
    %910 = vmatpush1.msra.mxu0 %v870
    %911 = vmatprep.subr.mxu0 0.0
    %912 = vmatpush1.msra.mxu0 %v875
    %913 = vmatprep.subr.mxu0 0.0
    %914 = vmatpush1.msra.mxu0 %v880
    %915 = vmatprep.subr.mxu0 0.0
    %916 = vmatpush1.msra.mxu0 0.0
    %917 = vmatprep.subr.mxu0 0.0
    %918 = vmatpush1.msra.mxu0 0.0
    %919 = vmatprep.subr.mxu0 0.0
    %920 = vmatpush1.msra.mxu0 0.0
    %921 = vmatprep.subr.mxu0 0.0
    %922 = vmatpush1.msra.mxu0 0.0
    %923 = vmatprep.subr.mxu0 0.0
    %924 = vmatpush1.msra.mxu0 0.0
    %925 = vmatprep.subr.mxu0 0.0
    %926 = vmatpush1.msra.mxu0 0.0
    %927 = vmatprep.subr.mxu0 0.0
    %928 = vmatpush1.msra.mxu0 0.0
    %929 = vmatprep.subr.mxu0 0.0
    %930 = vmatpush1.msra.mxu0 0.0
    %931 = vmatprep.subr.mxu0 0.0
    %932 = vmatpush1.msra.mxu0 0.0
    %933 = vmatprep.subr.mxu0 0.0
    %934 = vmatpush1.msra.mxu0 0.0
    %935 = vmatprep.subr.mxu0 0.0
    %936 = vmatpush1.msra.mxu0 0.0
    %937 = vmatprep.subr.mxu0 0.0
    %938 = vmatpush1.msra.mxu0 0.0
    %939 = vmatprep.subr.mxu0 0.0
    %940 = vmatpush1.msra.mxu0 0.0
    %941 = vmatprep.subr.mxu0 0.0
    %942 = vmatpush1.msra.mxu0 0.0
    %943 = vmatprep.subr.mxu0 0.0
    %944 = vmatpush1.msra.mxu0 0.0
    %945 = vmatprep.subr.mxu0 0.0
    %946 = vmatpush1.msra.mxu0 0.0
    %947 = vmatprep.mubr.f32.mxu0 0.0
    %948 = vmatmul.mubr.f32.gmra.mrb[0].mxu0 %v722
    %v949 = vpop.f32.mrb[0].mxu0
    %v950 = vadd.f32 0.0, %v949
    %v951 = vpop.f32.mrb[0].mxu0
    %952 = vmatprep.mubr.f32.mxu0 0.0
    %953 = vmatmul.mubr.f32.gmra.mrb[0].mxu0 %v723
    %v954 = vpop.f32.mrb[0].mxu0
    %v955 = vadd.f32 0.0, %v954
    %v956 = vpop.f32.mrb[0].mxu0
    %957 = vmatprep.mubr.f32.mxu0 0.0
    %958 = vmatmul.mubr.f32.gmra.mrb[0].mxu0 %v724
    %v959 = vpop.f32.mrb[0].mxu0
    %v960 = vadd.f32 0.0, %v959
    %v961 = vpop.f32.mrb[0].mxu0
    %962 = vmatprep.mubr.f32.mxu0 0.0
    %963 = vmatmul.mubr.f32.gmra.mrb[0].mxu0 %v725
    %v964 = vpop.f32.mrb[0].mxu0
    %v965 = vadd.f32 0.0, %v964
    %v966 = vpop.f32.mrb[0].mxu0
    %967 = vmatprep.mubr.f32.mxu0 0.0
    %968 = vmatmul.mubr.f32.gmra.mrb[0].mxu0 %v726
    %v969 = vpop.f32.mrb[0].mxu0
    %v970 = vadd.f32 0.0, %v969
    %v971 = vpop.f32.mrb[0].mxu0
    %972 = vmatprep.mubr.f32.mxu0 0.0
    %973 = vmatmul.mubr.f32.gmra.mrb[0].mxu0 %v727
    %v974 = vpop.f32.mrb[0].mxu0
    %v975 = vadd.f32 0.0, %v974
    %v976 = vpop.f32.mrb[0].mxu0
    %977 = vmatprep.mubr.f32.mxu0 0.0
    %978 = vmatmul.mubr.f32.gmra.mrb[0].mxu0 %v728
    %v979 = vpop.f32.mrb[0].mxu0
    %v980 = vadd.f32 0.0, %v979
    %v981 = vpop.f32.mrb[0].mxu0
    %982 = vmatprep.mubr.f32.mxu0 0.0
    %983 = vmatmul.mubr.f32.gmra.mrb[0].mxu0 %v729
    %v984 = vpop.f32.mrb[0].mxu0
    %v985 = vadd.f32 0.0, %v984
    %v986 = vpop.f32.mrb[0].mxu0
    %987 = vmatprep.mubr.f32.mxu0 0.0
    %988 = vmatmul.mubr.f32.gmra.mrb[0].mxu0 %v730
    %v989 = vpop.f32.mrb[0].mxu0
    %v990 = vadd.f32 0.0, %v989
    %v991 = vpop.f32.mrb[0].mxu0
    %992 = vmatprep.mubr.f32.mxu0 0.0
    %993 = vmatmul.mubr.f32.gmra.mrb[0].mxu0 %v731
    %v994 = vpop.f32.mrb[0].mxu0
    %v995 = vadd.f32 0.0, %v994
    %v996 = vpop.f32.mrb[0].mxu0
    %997 = vmatprep.mubr.f32.mxu0 0.0
    %998 = vmatmul.mubr.f32.gmra.mrb[0].mxu0 %v732
    %v999 = vpop.f32.mrb[0].mxu0
    %v1000 = vadd.f32 0.0, %v999
    %v1001 = vpop.f32.mrb[0].mxu0
    %1002 = vmatprep.mubr.f32.mxu0 0.0
    %1003 = vmatmul.mubr.f32.gmra.mrb[0].mxu0 %v733
    %v1004 = vpop.f32.mrb[0].mxu0
    %v1005 = vadd.f32 0.0, %v1004
    %v1006 = vpop.f32.mrb[0].mxu0
    %1007 = vmatprep.mubr.f32.mxu0 0.0
    %1008 = vmatmul.mubr.f32.gmra.mrb[0].mxu0 %v734
    %v1009 = vpop.f32.mrb[0].mxu0
    %v1010 = vadd.f32 0.0, %v1009
    %v1011 = vpop.f32.mrb[0].mxu0
    %1012 = vmatprep.mubr.f32.mxu0 0.0
    %1013 = vmatmul.mubr.f32.gmra.mrb[0].mxu0 %v735
    %v1014 = vpop.f32.mrb[0].mxu0
    %v1015 = vadd.f32 0.0, %v1014
    %v1016 = vpop.f32.mrb[0].mxu0
    %1017 = vmatprep.mubr.f32.mxu0 0.0
    %1018 = vmatmul.mubr.f32.gmra.mrb[0].mxu0 %v736
    %v1019 = vpop.f32.mrb[0].mxu0
    %v1020 = vadd.f32 0.0, %v1019
    %v1021 = vpop.f32.mrb[0].mxu0
    %1022 = vmatprep.mubr.f32.mxu0 0.0
    %1023 = vmatmul.mubr.f32.gmra.mrb[0].mxu0 %v737
    %v1024 = vpop.f32.mrb[0].mxu0
    %v1025 = vadd.f32 0.0, %v1024
    %v1026 = vpop.f32.mrb[0].mxu0
    %1027 = vdwg.mxu0
    %v1028 = vadd.f32 %v722, %v950
    %v1029 = vadd.f32 %v723, %v955
    %v1030 = vadd.f32 %v724, %v960
    %v1031 = vadd.f32 %v725, %v965
    %v1032 = vadd.f32 %v726, %v970
    %v1033 = vadd.f32 %v727, %v975
    %v1034 = vadd.f32 %v728, %v980
    %v1035 = vadd.f32 %v729, %v985
    %v1036 = vadd.f32 %v730, %v990
    %v1037 = vadd.f32 %v731, %v995
    %v1038 = vadd.f32 %v732, %v1000
    %v1039 = vadd.f32 %v733, %v1005
    %v1040 = vadd.f32 %v734, %v1010
    %v1041 = vadd.f32 %v735, %v1015
    %v1042 = vadd.f32 %v736, %v1020
    %v1043 = vadd.f32 %v737, %v1025
    %1044 = vmatprep.subr.mxu0 0.0
    %1045 = vmatpush1.msra.mxu0 %v805
    %1046 = vmatprep.subr.mxu0 0.0
    %1047 = vmatpush1.msra.mxu0 %v810
    %1048 = vmatprep.subr.mxu0 0.0
    %1049 = vmatpush1.msra.mxu0 %v815
    %1050 = vmatprep.subr.mxu0 0.0
    %1051 = vmatpush1.msra.mxu0 %v820
    %1052 = vmatprep.subr.mxu0 0.0
    %1053 = vmatpush1.msra.mxu0 %v825
    %1054 = vmatprep.subr.mxu0 0.0
    %1055 = vmatpush1.msra.mxu0 %v830
    %1056 = vmatprep.subr.mxu0 0.0
    %1057 = vmatpush1.msra.mxu0 %v835
    %1058 = vmatprep.subr.mxu0 0.0
    %1059 = vmatpush1.msra.mxu0 %v840
    %1060 = vmatprep.subr.mxu0 0.0
    %1061 = vmatpush1.msra.mxu0 %v845
    %1062 = vmatprep.subr.mxu0 0.0
    %1063 = vmatpush1.msra.mxu0 %v850
    %1064 = vmatprep.subr.mxu0 0.0
    %1065 = vmatpush1.msra.mxu0 %v855
    %1066 = vmatprep.subr.mxu0 0.0
    %1067 = vmatpush1.msra.mxu0 %v860
    %1068 = vmatprep.subr.mxu0 0.0
    %1069 = vmatpush1.msra.mxu0 %v865
    %1070 = vmatprep.subr.mxu0 0.0
    %1071 = vmatpush1.msra.mxu0 %v870
    %1072 = vmatprep.subr.mxu0 0.0
    %1073 = vmatpush1.msra.mxu0 %v875
    %1074 = vmatprep.subr.mxu0 0.0
    %1075 = vmatpush1.msra.mxu0 %v880
    %1076 = vmatprep.subr.mxu0 0.0
    %1077 = vmatpush1.msra.mxu0 0.0
    %1078 = vmatprep.subr.mxu0 0.0
    %1079 = vmatpush1.msra.mxu0 0.0
    %1080 = vmatprep.subr.mxu0 0.0
    %1081 = vmatpush1.msra.mxu0 0.0
    %1082 = vmatprep.subr.mxu0 0.0
    %1083 = vmatpush1.msra.mxu0 0.0
    %1084 = vmatprep.subr.mxu0 0.0
    %1085 = vmatpush1.msra.mxu0 0.0
    %1086 = vmatprep.subr.mxu0 0.0
    %1087 = vmatpush1.msra.mxu0 0.0
    %1088 = vmatprep.subr.mxu0 0.0
    %1089 = vmatpush1.msra.mxu0 0.0
    %1090 = vmatprep.subr.mxu0 0.0
    %1091 = vmatpush1.msra.mxu0 0.0
    %1092 = vmatprep.subr.mxu0 0.0
    %1093 = vmatpush1.msra.mxu0 0.0
    %1094 = vmatprep.subr.mxu0 0.0
    %1095 = vmatpush1.msra.mxu0 0.0
    %1096 = vmatprep.subr.mxu0 0.0
    %1097 = vmatpush1.msra.mxu0 0.0
    %1098 = vmatprep.subr.mxu0 0.0
    %1099 = vmatpush1.msra.mxu0 0.0
    %1100 = vmatprep.subr.mxu0 0.0
    %1101 = vmatpush1.msra.mxu0 0.0
    %1102 = vmatprep.subr.mxu0 0.0
    %1103 = vmatpush1.msra.mxu0 0.0
    %1104 = vmatprep.subr.mxu0 0.0
    %1105 = vmatpush1.msra.mxu0 0.0
    %1106 = vmatprep.subr.mxu0 0.0
    %1107 = vmatpush1.msra.mxu0 0.0
    %1108 = vmatprep.mubr.f32.mxu0 0.0
    %1109 = vmatmul.mubr.f32.gmra.mrb[0].mxu0 %v805
    %v1110 = vpop.f32.mrb[0].mxu0
    %v1111 = vadd.f32 0.0, %v1110
    %v1112 = vpop.f32.mrb[0].mxu0
    %1113 = vmatprep.mubr.f32.mxu0 0.0
    %1114 = vmatmul.mubr.f32.gmra.mrb[0].mxu0 %v810
    %v1115 = vpop.f32.mrb[0].mxu0
    %v1116 = vadd.f32 0.0, %v1115
    %v1117 = vpop.f32.mrb[0].mxu0
    %1118 = vmatprep.mubr.f32.mxu0 0.0
    %1119 = vmatmul.mubr.f32.gmra.mrb[0].mxu0 %v815
    %v1120 = vpop.f32.mrb[0].mxu0
    %v1121 = vadd.f32 0.0, %v1120
    %v1122 = vpop.f32.mrb[0].mxu0
    %1123 = vmatprep.mubr.f32.mxu0 0.0
    %1124 = vmatmul.mubr.f32.gmra.mrb[0].mxu0 %v820
    %v1125 = vpop.f32.mrb[0].mxu0
    %v1126 = vadd.f32 0.0, %v1125
    %v1127 = vpop.f32.mrb[0].mxu0
    %1128 = vmatprep.mubr.f32.mxu0 0.0
    %1129 = vmatmul.mubr.f32.gmra.mrb[0].mxu0 %v825
    %v1130 = vpop.f32.mrb[0].mxu0
    %v1131 = vadd.f32 0.0, %v1130
    %v1132 = vpop.f32.mrb[0].mxu0
    %1133 = vmatprep.mubr.f32.mxu0 0.0
    %1134 = vmatmul.mubr.f32.gmra.mrb[0].mxu0 %v830
    %v1135 = vpop.f32.mrb[0].mxu0
    %v1136 = vadd.f32 0.0, %v1135
    %v1137 = vpop.f32.mrb[0].mxu0
    %1138 = vmatprep.mubr.f32.mxu0 0.0
    %1139 = vmatmul.mubr.f32.gmra.mrb[0].mxu0 %v835
    %v1140 = vpop.f32.mrb[0].mxu0
    %v1141 = vadd.f32 0.0, %v1140
    %v1142 = vpop.f32.mrb[0].mxu0
    %1143 = vmatprep.mubr.f32.mxu0 0.0
    %1144 = vmatmul.mubr.f32.gmra.mrb[0].mxu0 %v840
    %v1145 = vpop.f32.mrb[0].mxu0
    %v1146 = vadd.f32 0.0, %v1145
    %v1147 = vpop.f32.mrb[0].mxu0
    %1148 = vmatprep.mubr.f32.mxu0 0.0
    %1149 = vmatmul.mubr.f32.gmra.mrb[0].mxu0 %v845
    %v1150 = vpop.f32.mrb[0].mxu0
    %v1151 = vadd.f32 0.0, %v1150
    %v1152 = vpop.f32.mrb[0].mxu0
    %1153 = vmatprep.mubr.f32.mxu0 0.0
    %1154 = vmatmul.mubr.f32.gmra.mrb[0].mxu0 %v850
    %v1155 = vpop.f32.mrb[0].mxu0
    %v1156 = vadd.f32 0.0, %v1155
    %v1157 = vpop.f32.mrb[0].mxu0
    %1158 = vmatprep.mubr.f32.mxu0 0.0
    %1159 = vmatmul.mubr.f32.gmra.mrb[0].mxu0 %v855
    %v1160 = vpop.f32.mrb[0].mxu0
    %v1161 = vadd.f32 0.0, %v1160
    %v1162 = vpop.f32.mrb[0].mxu0
    %1163 = vmatprep.mubr.f32.mxu0 0.0
    %1164 = vmatmul.mubr.f32.gmra.mrb[0].mxu0 %v860
    %v1165 = vpop.f32.mrb[0].mxu0
    %v1166 = vadd.f32 0.0, %v1165
    %v1167 = vpop.f32.mrb[0].mxu0
    %1168 = vmatprep.mubr.f32.mxu0 0.0
    %1169 = vmatmul.mubr.f32.gmra.mrb[0].mxu0 %v865
    %v1170 = vpop.f32.mrb[0].mxu0
    %v1171 = vadd.f32 0.0, %v1170
    %v1172 = vpop.f32.mrb[0].mxu0
    %1173 = vmatprep.mubr.f32.mxu0 0.0
    %1174 = vmatmul.mubr.f32.gmra.mrb[0].mxu0 %v870
    %v1175 = vpop.f32.mrb[0].mxu0
    %v1176 = vadd.f32 0.0, %v1175
    %v1177 = vpop.f32.mrb[0].mxu0
    %1178 = vmatprep.mubr.f32.mxu0 0.0
    %1179 = vmatmul.mubr.f32.gmra.mrb[0].mxu0 %v875
    %v1180 = vpop.f32.mrb[0].mxu0
    %v1181 = vadd.f32 0.0, %v1180
    %v1182 = vpop.f32.mrb[0].mxu0
    %1183 = vmatprep.mubr.f32.mxu0 0.0
    %1184 = vmatmul.mubr.f32.gmra.mrb[0].mxu0 %v880
    %v1185 = vpop.f32.mrb[0].mxu0
    %v1186 = vadd.f32 0.0, %v1185
    %v1187 = vpop.f32.mrb[0].mxu0
    %1188 = vdwg.mxu0
    %1189 = vmatprep.subr.mxu0 0.0
    %1190 = vmatpush1.msra.mxu0 %v1111
    %1191 = vmatprep.subr.mxu0 0.0
    %1192 = vmatpush1.msra.mxu0 %v1116
    %1193 = vmatprep.subr.mxu0 0.0
    %1194 = vmatpush1.msra.mxu0 %v1121
    %1195 = vmatprep.subr.mxu0 0.0
    %1196 = vmatpush1.msra.mxu0 %v1126
    %1197 = vmatprep.subr.mxu0 0.0
    %1198 = vmatpush1.msra.mxu0 %v1131
    %1199 = vmatprep.subr.mxu0 0.0
    %1200 = vmatpush1.msra.mxu0 %v1136
    %1201 = vmatprep.subr.mxu0 0.0
    %1202 = vmatpush1.msra.mxu0 %v1141
    %1203 = vmatprep.subr.mxu0 0.0
    %1204 = vmatpush1.msra.mxu0 %v1146
    %1205 = vmatprep.subr.mxu0 0.0
    %1206 = vmatpush1.msra.mxu0 %v1151
    %1207 = vmatprep.subr.mxu0 0.0
    %1208 = vmatpush1.msra.mxu0 %v1156
    %1209 = vmatprep.subr.mxu0 0.0
    %1210 = vmatpush1.msra.mxu0 %v1161
    %1211 = vmatprep.subr.mxu0 0.0
    %1212 = vmatpush1.msra.mxu0 %v1166
    %1213 = vmatprep.subr.mxu0 0.0
    %1214 = vmatpush1.msra.mxu0 %v1171
    %1215 = vmatprep.subr.mxu0 0.0
    %1216 = vmatpush1.msra.mxu0 %v1176
    %1217 = vmatprep.subr.mxu0 0.0
    %1218 = vmatpush1.msra.mxu0 %v1181
    %1219 = vmatprep.subr.mxu0 0.0
    %1220 = vmatpush1.msra.mxu0 %v1186
    %1221 = vmatprep.subr.mxu0 0.0
    %1222 = vmatpush1.msra.mxu0 0.0
    %1223 = vmatprep.subr.mxu0 0.0
    %1224 = vmatpush1.msra.mxu0 0.0
    %1225 = vmatprep.subr.mxu0 0.0
    %1226 = vmatpush1.msra.mxu0 0.0
    %1227 = vmatprep.subr.mxu0 0.0
    %1228 = vmatpush1.msra.mxu0 0.0
    %1229 = vmatprep.subr.mxu0 0.0
    %1230 = vmatpush1.msra.mxu0 0.0
    %1231 = vmatprep.subr.mxu0 0.0
    %1232 = vmatpush1.msra.mxu0 0.0
    %1233 = vmatprep.subr.mxu0 0.0
    %1234 = vmatpush1.msra.mxu0 0.0
    %1235 = vmatprep.subr.mxu0 0.0
    %1236 = vmatpush1.msra.mxu0 0.0
    %1237 = vmatprep.subr.mxu0 0.0
    %1238 = vmatpush1.msra.mxu0 0.0
    %1239 = vmatprep.subr.mxu0 0.0
    %1240 = vmatpush1.msra.mxu0 0.0
    %1241 = vmatprep.subr.mxu0 0.0
    %1242 = vmatpush1.msra.mxu0 0.0
    %1243 = vmatprep.subr.mxu0 0.0
    %1244 = vmatpush1.msra.mxu0 0.0
    %1245 = vmatprep.subr.mxu0 0.0
    %1246 = vmatpush1.msra.mxu0 0.0
    %1247 = vmatprep.subr.mxu0 0.0
    %1248 = vmatpush1.msra.mxu0 0.0
    %1249 = vmatprep.subr.mxu0 0.0
    %1250 = vmatpush1.msra.mxu0 0.0
    %1251 = vmatprep.subr.mxu0 0.0
    %1252 = vmatpush1.msra.mxu0 0.0
    %1253 = vmatprep.mubr.f32.mxu0 0.0
    %1254 = vmatmul.mubr.f32.gmra.mrb[0].mxu0 %v1028
    %v1255 = vpop.f32.mrb[0].mxu0
    %v1256 = vadd.f32 0.0, %v1255
    %v1257 = vpop.f32.mrb[0].mxu0
    %1258 = vmatprep.mubr.f32.mxu0 0.0
    %1259 = vmatmul.mubr.f32.gmra.mrb[0].mxu0 %v1029
    %v1260 = vpop.f32.mrb[0].mxu0
    %v1261 = vadd.f32 0.0, %v1260
    %v1262 = vpop.f32.mrb[0].mxu0
    %1263 = vmatprep.mubr.f32.mxu0 0.0
    %1264 = vmatmul.mubr.f32.gmra.mrb[0].mxu0 %v1030
    %v1265 = vpop.f32.mrb[0].mxu0
    %v1266 = vadd.f32 0.0, %v1265
    %v1267 = vpop.f32.mrb[0].mxu0
    %1268 = vmatprep.mubr.f32.mxu0 0.0
    %1269 = vmatmul.mubr.f32.gmra.mrb[0].mxu0 %v1031
    %v1270 = vpop.f32.mrb[0].mxu0
    %v1271 = vadd.f32 0.0, %v1270
    %v1272 = vpop.f32.mrb[0].mxu0
    %1273 = vmatprep.mubr.f32.mxu0 0.0
    %1274 = vmatmul.mubr.f32.gmra.mrb[0].mxu0 %v1032
    %v1275 = vpop.f32.mrb[0].mxu0
    %v1276 = vadd.f32 0.0, %v1275
    %v1277 = vpop.f32.mrb[0].mxu0
    %1278 = vmatprep.mubr.f32.mxu0 0.0
    %1279 = vmatmul.mubr.f32.gmra.mrb[0].mxu0 %v1033
    %v1280 = vpop.f32.mrb[0].mxu0
    %v1281 = vadd.f32 0.0, %v1280
    %v1282 = vpop.f32.mrb[0].mxu0
    %1283 = vmatprep.mubr.f32.mxu0 0.0
    %1284 = vmatmul.mubr.f32.gmra.mrb[0].mxu0 %v1034
    %v1285 = vpop.f32.mrb[0].mxu0
    %v1286 = vadd.f32 0.0, %v1285
    %v1287 = vpop.f32.mrb[0].mxu0
    %1288 = vmatprep.mubr.f32.mxu0 0.0
    %1289 = vmatmul.mubr.f32.gmra.mrb[0].mxu0 %v1035
    %v1290 = vpop.f32.mrb[0].mxu0
    %v1291 = vadd.f32 0.0, %v1290
    %v1292 = vpop.f32.mrb[0].mxu0
    %1293 = vmatprep.mubr.f32.mxu0 0.0
    %1294 = vmatmul.mubr.f32.gmra.mrb[0].mxu0 %v1036
    %v1295 = vpop.f32.mrb[0].mxu0
    %v1296 = vadd.f32 0.0, %v1295
    %v1297 = vpop.f32.mrb[0].mxu0
    %1298 = vmatprep.mubr.f32.mxu0 0.0
    %1299 = vmatmul.mubr.f32.gmra.mrb[0].mxu0 %v1037
    %v1300 = vpop.f32.mrb[0].mxu0
    %v1301 = vadd.f32 0.0, %v1300
    %v1302 = vpop.f32.mrb[0].mxu0
    %1303 = vmatprep.mubr.f32.mxu0 0.0
    %1304 = vmatmul.mubr.f32.gmra.mrb[0].mxu0 %v1038
    %v1305 = vpop.f32.mrb[0].mxu0
    %v1306 = vadd.f32 0.0, %v1305
    %v1307 = vpop.f32.mrb[0].mxu0
    %1308 = vmatprep.mubr.f32.mxu0 0.0
    %1309 = vmatmul.mubr.f32.gmra.mrb[0].mxu0 %v1039
    %v1310 = vpop.f32.mrb[0].mxu0
    %v1311 = vadd.f32 0.0, %v1310
    %v1312 = vpop.f32.mrb[0].mxu0
    %1313 = vmatprep.mubr.f32.mxu0 0.0
    %1314 = vmatmul.mubr.f32.gmra.mrb[0].mxu0 %v1040
    %v1315 = vpop.f32.mrb[0].mxu0
    %v1316 = vadd.f32 0.0, %v1315
    %v1317 = vpop.f32.mrb[0].mxu0
    %1318 = vmatprep.mubr.f32.mxu0 0.0
    %1319 = vmatmul.mubr.f32.gmra.mrb[0].mxu0 %v1041
    %v1320 = vpop.f32.mrb[0].mxu0
    %v1321 = vadd.f32 0.0, %v1320
    %v1322 = vpop.f32.mrb[0].mxu0
    %1323 = vmatprep.mubr.f32.mxu0 0.0
    %1324 = vmatmul.mubr.f32.gmra.mrb[0].mxu0 %v1042
    %v1325 = vpop.f32.mrb[0].mxu0
    %v1326 = vadd.f32 0.0, %v1325
    %v1327 = vpop.f32.mrb[0].mxu0
    %1328 = vmatprep.mubr.f32.mxu0 0.0
    %1329 = vmatmul.mubr.f32.gmra.mrb[0].mxu0 %v1043
    %v1330 = vpop.f32.mrb[0].mxu0
    %v1331 = vadd.f32 0.0, %v1330
    %v1332 = vpop.f32.mrb[0].mxu0
    %1333 = vdwg.mxu0
    %v1334 = vadd.f32 %v1028, %v1256
    %v1335 = vadd.f32 %v1029, %v1261
    %v1336 = vadd.f32 %v1030, %v1266
    %v1337 = vadd.f32 %v1031, %v1271
    %v1338 = vadd.f32 %v1032, %v1276
    %v1339 = vadd.f32 %v1033, %v1281
    %v1340 = vadd.f32 %v1034, %v1286
    %v1341 = vadd.f32 %v1035, %v1291
    %v1342 = vadd.f32 %v1036, %v1296
    %v1343 = vadd.f32 %v1037, %v1301
    %v1344 = vadd.f32 %v1038, %v1306
    %v1345 = vadd.f32 %v1039, %v1311
    %v1346 = vadd.f32 %v1040, %v1316
    %v1347 = vadd.f32 %v1041, %v1321
    %v1348 = vadd.f32 %v1042, %v1326
    %v1349 = vadd.f32 %v1043, %v1331
    %1350 = vmatprep.subr.mxu0 0.0
    %1351 = vmatpush1.msra.mxu0 %v1111
    %1352 = vmatprep.subr.mxu0 0.0
    %1353 = vmatpush1.msra.mxu0 %v1116
    %1354 = vmatprep.subr.mxu0 0.0
    %1355 = vmatpush1.msra.mxu0 %v1121
    %1356 = vmatprep.subr.mxu0 0.0
    %1357 = vmatpush1.msra.mxu0 %v1126
    %1358 = vmatprep.subr.mxu0 0.0
    %1359 = vmatpush1.msra.mxu0 %v1131
    %1360 = vmatprep.subr.mxu0 0.0
    %1361 = vmatpush1.msra.mxu0 %v1136
    %1362 = vmatprep.subr.mxu0 0.0
    %1363 = vmatpush1.msra.mxu0 %v1141
    %1364 = vmatprep.subr.mxu0 0.0
    %1365 = vmatpush1.msra.mxu0 %v1146
    %1366 = vmatprep.subr.mxu0 0.0
    %1367 = vmatpush1.msra.mxu0 %v1151
    %1368 = vmatprep.subr.mxu0 0.0
    %1369 = vmatpush1.msra.mxu0 %v1156
    %1370 = vmatprep.subr.mxu0 0.0
    %1371 = vmatpush1.msra.mxu0 %v1161
    %1372 = vmatprep.subr.mxu0 0.0
    %1373 = vmatpush1.msra.mxu0 %v1166
    %1374 = vmatprep.subr.mxu0 0.0
    %1375 = vmatpush1.msra.mxu0 %v1171
    %1376 = vmatprep.subr.mxu0 0.0
    %1377 = vmatpush1.msra.mxu0 %v1176
    %1378 = vmatprep.subr.mxu0 0.0
    %1379 = vmatpush1.msra.mxu0 %v1181
    %1380 = vmatprep.subr.mxu0 0.0
    %1381 = vmatpush1.msra.mxu0 %v1186
    %1382 = vmatprep.subr.mxu0 0.0
    %1383 = vmatpush1.msra.mxu0 0.0
    %1384 = vmatprep.subr.mxu0 0.0
    %1385 = vmatpush1.msra.mxu0 0.0
    %1386 = vmatprep.subr.mxu0 0.0
    %1387 = vmatpush1.msra.mxu0 0.0
    %1388 = vmatprep.subr.mxu0 0.0
    %1389 = vmatpush1.msra.mxu0 0.0
    %1390 = vmatprep.subr.mxu0 0.0
    %1391 = vmatpush1.msra.mxu0 0.0
    %1392 = vmatprep.subr.mxu0 0.0
    %1393 = vmatpush1.msra.mxu0 0.0
    %1394 = vmatprep.subr.mxu0 0.0
    %1395 = vmatpush1.msra.mxu0 0.0
    %1396 = vmatprep.subr.mxu0 0.0
    %1397 = vmatpush1.msra.mxu0 0.0
    %1398 = vmatprep.subr.mxu0 0.0
    %1399 = vmatpush1.msra.mxu0 0.0
    %1400 = vmatprep.subr.mxu0 0.0
    %1401 = vmatpush1.msra.mxu0 0.0
    %1402 = vmatprep.subr.mxu0 0.0
    %1403 = vmatpush1.msra.mxu0 0.0
    %1404 = vmatprep.subr.mxu0 0.0
    %1405 = vmatpush1.msra.mxu0 0.0
    %1406 = vmatprep.subr.mxu0 0.0
    %1407 = vmatpush1.msra.mxu0 0.0
    %1408 = vmatprep.subr.mxu0 0.0
    %1409 = vmatpush1.msra.mxu0 0.0
    %1410 = vmatprep.subr.mxu0 0.0
    %1411 = vmatpush1.msra.mxu0 0.0
    %1412 = vmatprep.subr.mxu0 0.0
    %1413 = vmatpush1.msra.mxu0 0.0
    %1414 = vmatprep.mubr.f32.mxu0 0.0
    %1415 = vmatmul.mubr.f32.gmra.mrb[0].mxu0 %v1111
    %v1416 = vpop.f32.mrb[0].mxu0
    %v1417 = vadd.f32 0.0, %v1416
    %v1418 = vpop.f32.mrb[0].mxu0
    %1419 = vmatprep.mubr.f32.mxu0 0.0
    %1420 = vmatmul.mubr.f32.gmra.mrb[0].mxu0 %v1116
    %v1421 = vpop.f32.mrb[0].mxu0
    %v1422 = vadd.f32 0.0, %v1421
    %v1423 = vpop.f32.mrb[0].mxu0
    %1424 = vmatprep.mubr.f32.mxu0 0.0
    %1425 = vmatmul.mubr.f32.gmra.mrb[0].mxu0 %v1121
    %v1426 = vpop.f32.mrb[0].mxu0
    %v1427 = vadd.f32 0.0, %v1426
    %v1428 = vpop.f32.mrb[0].mxu0
    %1429 = vmatprep.mubr.f32.mxu0 0.0
    %1430 = vmatmul.mubr.f32.gmra.mrb[0].mxu0 %v1126
    %v1431 = vpop.f32.mrb[0].mxu0
    %v1432 = vadd.f32 0.0, %v1431
    %v1433 = vpop.f32.mrb[0].mxu0
    %1434 = vmatprep.mubr.f32.mxu0 0.0
    %1435 = vmatmul.mubr.f32.gmra.mrb[0].mxu0 %v1131
    %v1436 = vpop.f32.mrb[0].mxu0
    %v1437 = vadd.f32 0.0, %v1436
    %v1438 = vpop.f32.mrb[0].mxu0
    %1439 = vmatprep.mubr.f32.mxu0 0.0
    %1440 = vmatmul.mubr.f32.gmra.mrb[0].mxu0 %v1136
    %v1441 = vpop.f32.mrb[0].mxu0
    %v1442 = vadd.f32 0.0, %v1441
    %v1443 = vpop.f32.mrb[0].mxu0
    %1444 = vmatprep.mubr.f32.mxu0 0.0
    %1445 = vmatmul.mubr.f32.gmra.mrb[0].mxu0 %v1141
    %v1446 = vpop.f32.mrb[0].mxu0
    %v1447 = vadd.f32 0.0, %v1446
    %v1448 = vpop.f32.mrb[0].mxu0
    %1449 = vmatprep.mubr.f32.mxu0 0.0
    %1450 = vmatmul.mubr.f32.gmra.mrb[0].mxu0 %v1146
    %v1451 = vpop.f32.mrb[0].mxu0
    %v1452 = vadd.f32 0.0, %v1451
    %v1453 = vpop.f32.mrb[0].mxu0
    %1454 = vmatprep.mubr.f32.mxu0 0.0
    %1455 = vmatmul.mubr.f32.gmra.mrb[0].mxu0 %v1151
    %v1456 = vpop.f32.mrb[0].mxu0
    %v1457 = vadd.f32 0.0, %v1456
    %v1458 = vpop.f32.mrb[0].mxu0
    %1459 = vmatprep.mubr.f32.mxu0 0.0
    %1460 = vmatmul.mubr.f32.gmra.mrb[0].mxu0 %v1156
    %v1461 = vpop.f32.mrb[0].mxu0
    %v1462 = vadd.f32 0.0, %v1461
    %v1463 = vpop.f32.mrb[0].mxu0
    %1464 = vmatprep.mubr.f32.mxu0 0.0
    %1465 = vmatmul.mubr.f32.gmra.mrb[0].mxu0 %v1161
    %v1466 = vpop.f32.mrb[0].mxu0
    %v1467 = vadd.f32 0.0, %v1466
    %v1468 = vpop.f32.mrb[0].mxu0
    %1469 = vmatprep.mubr.f32.mxu0 0.0
    %1470 = vmatmul.mubr.f32.gmra.mrb[0].mxu0 %v1166
    %v1471 = vpop.f32.mrb[0].mxu0
    %v1472 = vadd.f32 0.0, %v1471
    %v1473 = vpop.f32.mrb[0].mxu0
    %1474 = vmatprep.mubr.f32.mxu0 0.0
    %1475 = vmatmul.mubr.f32.gmra.mrb[0].mxu0 %v1171
    %v1476 = vpop.f32.mrb[0].mxu0
    %v1477 = vadd.f32 0.0, %v1476
    %v1478 = vpop.f32.mrb[0].mxu0
    %1479 = vmatprep.mubr.f32.mxu0 0.0
    %1480 = vmatmul.mubr.f32.gmra.mrb[0].mxu0 %v1176
    %v1481 = vpop.f32.mrb[0].mxu0
    %v1482 = vadd.f32 0.0, %v1481
    %v1483 = vpop.f32.mrb[0].mxu0
    %1484 = vmatprep.mubr.f32.mxu0 0.0
    %1485 = vmatmul.mubr.f32.gmra.mrb[0].mxu0 %v1181
    %v1486 = vpop.f32.mrb[0].mxu0
    %v1487 = vadd.f32 0.0, %v1486
    %v1488 = vpop.f32.mrb[0].mxu0
    %1489 = vmatprep.mubr.f32.mxu0 0.0
    %1490 = vmatmul.mubr.f32.gmra.mrb[0].mxu0 %v1186
    %v1491 = vpop.f32.mrb[0].mxu0
    %v1492 = vadd.f32 0.0, %v1491
    %v1493 = vpop.f32.mrb[0].mxu0
    %1494 = vdwg.mxu0
    %1495 = vmatprep.subr.mxu0 0.0
    %1496 = vmatpush1.msra.mxu0 %v1417
    %1497 = vmatprep.subr.mxu0 0.0
    %1498 = vmatpush1.msra.mxu0 %v1422
    %1499 = vmatprep.subr.mxu0 0.0
    %1500 = vmatpush1.msra.mxu0 %v1427
    %1501 = vmatprep.subr.mxu0 0.0
    %1502 = vmatpush1.msra.mxu0 %v1432
    %1503 = vmatprep.subr.mxu0 0.0
    %1504 = vmatpush1.msra.mxu0 %v1437
    %1505 = vmatprep.subr.mxu0 0.0
    %1506 = vmatpush1.msra.mxu0 %v1442
    %1507 = vmatprep.subr.mxu0 0.0
    %1508 = vmatpush1.msra.mxu0 %v1447
    %1509 = vmatprep.subr.mxu0 0.0
    %1510 = vmatpush1.msra.mxu0 %v1452
    %1511 = vmatprep.subr.mxu0 0.0
    %1512 = vmatpush1.msra.mxu0 %v1457
    %1513 = vmatprep.subr.mxu0 0.0
    %1514 = vmatpush1.msra.mxu0 %v1462
    %1515 = vmatprep.subr.mxu0 0.0
    %1516 = vmatpush1.msra.mxu0 %v1467
    %1517 = vmatprep.subr.mxu0 0.0
    %1518 = vmatpush1.msra.mxu0 %v1472
    %1519 = vmatprep.subr.mxu0 0.0
    %1520 = vmatpush1.msra.mxu0 %v1477
    %1521 = vmatprep.subr.mxu0 0.0
    %1522 = vmatpush1.msra.mxu0 %v1482
    %1523 = vmatprep.subr.mxu0 0.0
    %1524 = vmatpush1.msra.mxu0 %v1487
    %1525 = vmatprep.subr.mxu0 0.0
    %1526 = vmatpush1.msra.mxu0 %v1492
    %1527 = vmatprep.subr.mxu0 0.0
    %1528 = vmatpush1.msra.mxu0 0.0
    %1529 = vmatprep.subr.mxu0 0.0
    %1530 = vmatpush1.msra.mxu0 0.0
    %1531 = vmatprep.subr.mxu0 0.0
    %1532 = vmatpush1.msra.mxu0 0.0
    %1533 = vmatprep.subr.mxu0 0.0
    %1534 = vmatpush1.msra.mxu0 0.0
    %1535 = vmatprep.subr.mxu0 0.0
    %1536 = vmatpush1.msra.mxu0 0.0
    %1537 = vmatprep.subr.mxu0 0.0
    %1538 = vmatpush1.msra.mxu0 0.0
    %1539 = vmatprep.subr.mxu0 0.0
    %1540 = vmatpush1.msra.mxu0 0.0
    %1541 = vmatprep.subr.mxu0 0.0
    %1542 = vmatpush1.msra.mxu0 0.0
    %1543 = vmatprep.subr.mxu0 0.0
    %1544 = vmatpush1.msra.mxu0 0.0
    %1545 = vmatprep.subr.mxu0 0.0
    %1546 = vmatpush1.msra.mxu0 0.0
    %1547 = vmatprep.subr.mxu0 0.0
    %1548 = vmatpush1.msra.mxu0 0.0
    %1549 = vmatprep.subr.mxu0 0.0
    %1550 = vmatpush1.msra.mxu0 0.0
    %1551 = vmatprep.subr.mxu0 0.0
    %1552 = vmatpush1.msra.mxu0 0.0
    %1553 = vmatprep.subr.mxu0 0.0
    %1554 = vmatpush1.msra.mxu0 0.0
    %1555 = vmatprep.subr.mxu0 0.0
    %1556 = vmatpush1.msra.mxu0 0.0
    %1557 = vmatprep.subr.mxu0 0.0
    %1558 = vmatpush1.msra.mxu0 0.0
    %1559 = vmatprep.mubr.f32.mxu0 0.0
    %1560 = vmatmul.mubr.f32.gmra.mrb[0].mxu0 %v1334
    %v1561 = vpop.f32.mrb[0].mxu0
    %v1562 = vadd.f32 0.0, %v1561
    %v1563 = vpop.f32.mrb[0].mxu0
    %1564 = vmatprep.mubr.f32.mxu0 0.0
    %1565 = vmatmul.mubr.f32.gmra.mrb[0].mxu0 %v1335
    %v1566 = vpop.f32.mrb[0].mxu0
    %v1567 = vadd.f32 0.0, %v1566
    %v1568 = vpop.f32.mrb[0].mxu0
    %1569 = vmatprep.mubr.f32.mxu0 0.0
    %1570 = vmatmul.mubr.f32.gmra.mrb[0].mxu0 %v1336
    %v1571 = vpop.f32.mrb[0].mxu0
    %v1572 = vadd.f32 0.0, %v1571
    %v1573 = vpop.f32.mrb[0].mxu0
    %1574 = vmatprep.mubr.f32.mxu0 0.0
    %1575 = vmatmul.mubr.f32.gmra.mrb[0].mxu0 %v1337
    %v1576 = vpop.f32.mrb[0].mxu0
    %v1577 = vadd.f32 0.0, %v1576
    %v1578 = vpop.f32.mrb[0].mxu0
    %1579 = vmatprep.mubr.f32.mxu0 0.0
    %1580 = vmatmul.mubr.f32.gmra.mrb[0].mxu0 %v1338
    %v1581 = vpop.f32.mrb[0].mxu0
    %v1582 = vadd.f32 0.0, %v1581
    %v1583 = vpop.f32.mrb[0].mxu0
    %1584 = vmatprep.mubr.f32.mxu0 0.0
    %1585 = vmatmul.mubr.f32.gmra.mrb[0].mxu0 %v1339
    %v1586 = vpop.f32.mrb[0].mxu0
    %v1587 = vadd.f32 0.0, %v1586
    %v1588 = vpop.f32.mrb[0].mxu0
    %1589 = vmatprep.mubr.f32.mxu0 0.0
    %1590 = vmatmul.mubr.f32.gmra.mrb[0].mxu0 %v1340
    %v1591 = vpop.f32.mrb[0].mxu0
    %v1592 = vadd.f32 0.0, %v1591
    %v1593 = vpop.f32.mrb[0].mxu0
    %1594 = vmatprep.mubr.f32.mxu0 0.0
    %1595 = vmatmul.mubr.f32.gmra.mrb[0].mxu0 %v1341
    %v1596 = vpop.f32.mrb[0].mxu0
    %v1597 = vadd.f32 0.0, %v1596
    %v1598 = vpop.f32.mrb[0].mxu0
    %1599 = vmatprep.mubr.f32.mxu0 0.0
    %1600 = vmatmul.mubr.f32.gmra.mrb[0].mxu0 %v1342
    %v1601 = vpop.f32.mrb[0].mxu0
    %v1602 = vadd.f32 0.0, %v1601
    %v1603 = vpop.f32.mrb[0].mxu0
    %1604 = vmatprep.mubr.f32.mxu0 0.0
    %1605 = vmatmul.mubr.f32.gmra.mrb[0].mxu0 %v1343
    %v1606 = vpop.f32.mrb[0].mxu0
    %v1607 = vadd.f32 0.0, %v1606
    %v1608 = vpop.f32.mrb[0].mxu0
    %1609 = vmatprep.mubr.f32.mxu0 0.0
    %1610 = vmatmul.mubr.f32.gmra.mrb[0].mxu0 %v1344
    %v1611 = vpop.f32.mrb[0].mxu0
    %v1612 = vadd.f32 0.0, %v1611
    %v1613 = vpop.f32.mrb[0].mxu0
    %1614 = vmatprep.mubr.f32.mxu0 0.0
    %1615 = vmatmul.mubr.f32.gmra.mrb[0].mxu0 %v1345
    %v1616 = vpop.f32.mrb[0].mxu0
    %v1617 = vadd.f32 0.0, %v1616
    %v1618 = vpop.f32.mrb[0].mxu0
    %1619 = vmatprep.mubr.f32.mxu0 0.0
    %1620 = vmatmul.mubr.f32.gmra.mrb[0].mxu0 %v1346
    %v1621 = vpop.f32.mrb[0].mxu0
    %v1622 = vadd.f32 0.0, %v1621
    %v1623 = vpop.f32.mrb[0].mxu0
    %1624 = vmatprep.mubr.f32.mxu0 0.0
    %1625 = vmatmul.mubr.f32.gmra.mrb[0].mxu0 %v1347
    %v1626 = vpop.f32.mrb[0].mxu0
    %v1627 = vadd.f32 0.0, %v1626
    %v1628 = vpop.f32.mrb[0].mxu0
    %1629 = vmatprep.mubr.f32.mxu0 0.0
    %1630 = vmatmul.mubr.f32.gmra.mrb[0].mxu0 %v1348
    %v1631 = vpop.f32.mrb[0].mxu0
    %v1632 = vadd.f32 0.0, %v1631
    %v1633 = vpop.f32.mrb[0].mxu0
    %1634 = vmatprep.mubr.f32.mxu0 0.0
    %1635 = vmatmul.mubr.f32.gmra.mrb[0].mxu0 %v1349
    %v1636 = vpop.f32.mrb[0].mxu0
    %v1637 = vadd.f32 0.0, %v1636
    %v1638 = vpop.f32.mrb[0].mxu0
    %1639 = vdwg.mxu0
    %v1640 = vadd.f32 %v1334, %v1562
    %v1641 = vadd.f32 %v1335, %v1567
    %v1642 = vadd.f32 %v1336, %v1572
    %v1643 = vadd.f32 %v1337, %v1577
    %v1644 = vadd.f32 %v1338, %v1582
    %v1645 = vadd.f32 %v1339, %v1587
    %v1646 = vadd.f32 %v1340, %v1592
    %v1647 = vadd.f32 %v1341, %v1597
    %v1648 = vadd.f32 %v1342, %v1602
    %v1649 = vadd.f32 %v1343, %v1607
    %v1650 = vadd.f32 %v1344, %v1612
    %v1651 = vadd.f32 %v1345, %v1617
    %v1652 = vadd.f32 %v1346, %v1622
    %v1653 = vadd.f32 %v1347, %v1627
    %v1654 = vadd.f32 %v1348, %v1632
    %v1655 = vadd.f32 %v1349, %v1637
    %1656 = vmatprep.subr.mxu0 0.0
    %1657 = vmatpush1.msra.mxu0 %v1417
    %1658 = vmatprep.subr.mxu0 0.0
    %1659 = vmatpush1.msra.mxu0 %v1422
    %1660 = vmatprep.subr.mxu0 0.0
    %1661 = vmatpush1.msra.mxu0 %v1427
    %1662 = vmatprep.subr.mxu0 0.0
    %1663 = vmatpush1.msra.mxu0 %v1432
    %1664 = vmatprep.subr.mxu0 0.0
    %1665 = vmatpush1.msra.mxu0 %v1437
    %1666 = vmatprep.subr.mxu0 0.0
    %1667 = vmatpush1.msra.mxu0 %v1442
    %1668 = vmatprep.subr.mxu0 0.0
    %1669 = vmatpush1.msra.mxu0 %v1447
    %1670 = vmatprep.subr.mxu0 0.0
    %1671 = vmatpush1.msra.mxu0 %v1452
    %1672 = vmatprep.subr.mxu0 0.0
    %1673 = vmatpush1.msra.mxu0 %v1457
    %1674 = vmatprep.subr.mxu0 0.0
    %1675 = vmatpush1.msra.mxu0 %v1462
    %1676 = vmatprep.subr.mxu0 0.0
    %1677 = vmatpush1.msra.mxu0 %v1467
    %1678 = vmatprep.subr.mxu0 0.0
    %1679 = vmatpush1.msra.mxu0 %v1472
    %1680 = vmatprep.subr.mxu0 0.0
    %1681 = vmatpush1.msra.mxu0 %v1477
    %1682 = vmatprep.subr.mxu0 0.0
    %1683 = vmatpush1.msra.mxu0 %v1482
    %1684 = vmatprep.subr.mxu0 0.0
    %1685 = vmatpush1.msra.mxu0 %v1487
    %1686 = vmatprep.subr.mxu0 0.0
    %1687 = vmatpush1.msra.mxu0 %v1492
    %1688 = vmatprep.subr.mxu0 0.0
    %1689 = vmatpush1.msra.mxu0 0.0
    %1690 = vmatprep.subr.mxu0 0.0
    %1691 = vmatpush1.msra.mxu0 0.0
    %1692 = vmatprep.subr.mxu0 0.0
    %1693 = vmatpush1.msra.mxu0 0.0
    %1694 = vmatprep.subr.mxu0 0.0
    %1695 = vmatpush1.msra.mxu0 0.0
    %1696 = vmatprep.subr.mxu0 0.0
    %1697 = vmatpush1.msra.mxu0 0.0
    %1698 = vmatprep.subr.mxu0 0.0
    %1699 = vmatpush1.msra.mxu0 0.0
    %1700 = vmatprep.subr.mxu0 0.0
    %1701 = vmatpush1.msra.mxu0 0.0
    %1702 = vmatprep.subr.mxu0 0.0
    %1703 = vmatpush1.msra.mxu0 0.0
    %1704 = vmatprep.subr.mxu0 0.0
    %1705 = vmatpush1.msra.mxu0 0.0
    %1706 = vmatprep.subr.mxu0 0.0
    %1707 = vmatpush1.msra.mxu0 0.0
    %1708 = vmatprep.subr.mxu0 0.0
    %1709 = vmatpush1.msra.mxu0 0.0
    %1710 = vmatprep.subr.mxu0 0.0
    %1711 = vmatpush1.msra.mxu0 0.0
    %1712 = vmatprep.subr.mxu0 0.0
    %1713 = vmatpush1.msra.mxu0 0.0
    %1714 = vmatprep.subr.mxu0 0.0
    %1715 = vmatpush1.msra.mxu0 0.0
    %1716 = vmatprep.subr.mxu0 0.0
    %1717 = vmatpush1.msra.mxu0 0.0
    %1718 = vmatprep.subr.mxu0 0.0
    %1719 = vmatpush1.msra.mxu0 0.0
    %1720 = vmatprep.mubr.f32.mxu0 0.0
    %1721 = vmatmul.mubr.f32.gmra.mrb[0].mxu0 %v1417
    %v1722 = vpop.f32.mrb[0].mxu0
    %v1723 = vadd.f32 0.0, %v1722
    %v1724 = vpop.f32.mrb[0].mxu0
    %1725 = vmatprep.mubr.f32.mxu0 0.0
    %1726 = vmatmul.mubr.f32.gmra.mrb[0].mxu0 %v1422
    %v1727 = vpop.f32.mrb[0].mxu0
    %v1728 = vadd.f32 0.0, %v1727
    %v1729 = vpop.f32.mrb[0].mxu0
    %1730 = vmatprep.mubr.f32.mxu0 0.0
    %1731 = vmatmul.mubr.f32.gmra.mrb[0].mxu0 %v1427
    %v1732 = vpop.f32.mrb[0].mxu0
    %v1733 = vadd.f32 0.0, %v1732
    %v1734 = vpop.f32.mrb[0].mxu0
    %1735 = vmatprep.mubr.f32.mxu0 0.0
    %1736 = vmatmul.mubr.f32.gmra.mrb[0].mxu0 %v1432
    %v1737 = vpop.f32.mrb[0].mxu0
    %v1738 = vadd.f32 0.0, %v1737
    %v1739 = vpop.f32.mrb[0].mxu0
    %1740 = vmatprep.mubr.f32.mxu0 0.0
    %1741 = vmatmul.mubr.f32.gmra.mrb[0].mxu0 %v1437
    %v1742 = vpop.f32.mrb[0].mxu0
    %v1743 = vadd.f32 0.0, %v1742
    %v1744 = vpop.f32.mrb[0].mxu0
    %1745 = vmatprep.mubr.f32.mxu0 0.0
    %1746 = vmatmul.mubr.f32.gmra.mrb[0].mxu0 %v1442
    %v1747 = vpop.f32.mrb[0].mxu0
    %v1748 = vadd.f32 0.0, %v1747
    %v1749 = vpop.f32.mrb[0].mxu0
    %1750 = vmatprep.mubr.f32.mxu0 0.0
    %1751 = vmatmul.mubr.f32.gmra.mrb[0].mxu0 %v1447
    %v1752 = vpop.f32.mrb[0].mxu0
    %v1753 = vadd.f32 0.0, %v1752
    %v1754 = vpop.f32.mrb[0].mxu0
    %1755 = vmatprep.mubr.f32.mxu0 0.0
    %1756 = vmatmul.mubr.f32.gmra.mrb[0].mxu0 %v1452
    %v1757 = vpop.f32.mrb[0].mxu0
    %v1758 = vadd.f32 0.0, %v1757
    %v1759 = vpop.f32.mrb[0].mxu0
    %1760 = vmatprep.mubr.f32.mxu0 0.0
    %1761 = vmatmul.mubr.f32.gmra.mrb[0].mxu0 %v1457
    %v1762 = vpop.f32.mrb[0].mxu0
    %v1763 = vadd.f32 0.0, %v1762
    %v1764 = vpop.f32.mrb[0].mxu0
    %1765 = vmatprep.mubr.f32.mxu0 0.0
    %1766 = vmatmul.mubr.f32.gmra.mrb[0].mxu0 %v1462
    %v1767 = vpop.f32.mrb[0].mxu0
    %v1768 = vadd.f32 0.0, %v1767
    %v1769 = vpop.f32.mrb[0].mxu0
    %1770 = vmatprep.mubr.f32.mxu0 0.0
    %1771 = vmatmul.mubr.f32.gmra.mrb[0].mxu0 %v1467
    %v1772 = vpop.f32.mrb[0].mxu0
    %v1773 = vadd.f32 0.0, %v1772
    %v1774 = vpop.f32.mrb[0].mxu0
    %1775 = vmatprep.mubr.f32.mxu0 0.0
    %1776 = vmatmul.mubr.f32.gmra.mrb[0].mxu0 %v1472
    %v1777 = vpop.f32.mrb[0].mxu0
    %v1778 = vadd.f32 0.0, %v1777
    %v1779 = vpop.f32.mrb[0].mxu0
    %1780 = vmatprep.mubr.f32.mxu0 0.0
    %1781 = vmatmul.mubr.f32.gmra.mrb[0].mxu0 %v1477
    %v1782 = vpop.f32.mrb[0].mxu0
    %v1783 = vadd.f32 0.0, %v1782
    %v1784 = vpop.f32.mrb[0].mxu0
    %1785 = vmatprep.mubr.f32.mxu0 0.0
    %1786 = vmatmul.mubr.f32.gmra.mrb[0].mxu0 %v1482
    %v1787 = vpop.f32.mrb[0].mxu0
    %v1788 = vadd.f32 0.0, %v1787
    %v1789 = vpop.f32.mrb[0].mxu0
    %1790 = vmatprep.mubr.f32.mxu0 0.0
    %1791 = vmatmul.mubr.f32.gmra.mrb[0].mxu0 %v1487
    %v1792 = vpop.f32.mrb[0].mxu0
    %v1793 = vadd.f32 0.0, %v1792
    %v1794 = vpop.f32.mrb[0].mxu0
    %1795 = vmatprep.mubr.f32.mxu0 0.0
    %1796 = vmatmul.mubr.f32.gmra.mrb[0].mxu0 %v1492
    %v1797 = vpop.f32.mrb[0].mxu0
    %v1798 = vadd.f32 0.0, %v1797
    %v1799 = vpop.f32.mrb[0].mxu0
    %1800 = vdwg.mxu0
    %v1801 = vadd.f32 %v1640, %v1723
    %v1802 = vadd.f32 %v1641, %v1728
    %v1803 = vadd.f32 %v1642, %v1733
    %v1804 = vadd.f32 %v1643, %v1738
    %v1805 = vadd.f32 %v1644, %v1743
    %v1806 = vadd.f32 %v1645, %v1748
    %v1807 = vadd.f32 %v1646, %v1753
    %v1808 = vadd.f32 %v1647, %v1758
    %v1809 = vadd.f32 %v1648, %v1763
    %v1810 = vadd.f32 %v1649, %v1768
    %v1811 = vadd.f32 %v1650, %v1773
    %v1812 = vadd.f32 %v1651, %v1778
    %v1813 = vadd.f32 %v1652, %v1783
    %v1814 = vadd.f32 %v1653, %v1788
    %v1815 = vadd.f32 %v1654, %v1793
    %v1816 = vadd.f32 %v1655, %v1798
    %1817 = vmatprep.subr.mxu0 0.0
    %1818 = vmatpush1.msra.mxu0 %v278
    %1819 = vmatprep.subr.mxu0 0.0
    %1820 = vmatpush1.msra.mxu0 %v279
    %1821 = vmatprep.subr.mxu0 0.0
    %1822 = vmatpush1.msra.mxu0 %v280
    %1823 = vmatprep.subr.mxu0 0.0
    %1824 = vmatpush1.msra.mxu0 %v281
    %1825 = vmatprep.subr.mxu0 0.0
    %1826 = vmatpush1.msra.mxu0 %v282
    %1827 = vmatprep.subr.mxu0 0.0
    %1828 = vmatpush1.msra.mxu0 %v283
    %1829 = vmatprep.subr.mxu0 0.0
    %1830 = vmatpush1.msra.mxu0 %v284
    %1831 = vmatprep.subr.mxu0 0.0
    %1832 = vmatpush1.msra.mxu0 %v285
    %1833 = vmatprep.subr.mxu0 0.0
    %1834 = vmatpush1.msra.mxu0 %v286
    %1835 = vmatprep.subr.mxu0 0.0
    %1836 = vmatpush1.msra.mxu0 %v287
    %1837 = vmatprep.subr.mxu0 0.0
    %1838 = vmatpush1.msra.mxu0 %v288
    %1839 = vmatprep.subr.mxu0 0.0
    %1840 = vmatpush1.msra.mxu0 %v289
    %1841 = vmatprep.subr.mxu0 0.0
    %1842 = vmatpush1.msra.mxu0 %v290
    %1843 = vmatprep.subr.mxu0 0.0
    %1844 = vmatpush1.msra.mxu0 %v291
    %1845 = vmatprep.subr.mxu0 0.0
    %1846 = vmatpush1.msra.mxu0 %v292
    %1847 = vmatprep.subr.mxu0 0.0
    %1848 = vmatpush1.msra.mxu0 %v293
    %1849 = vmatprep.subr.mxu0 0.0
    %1850 = vmatpush1.msra.mxu0 0.0
    %1851 = vmatprep.subr.mxu0 0.0
    %1852 = vmatpush1.msra.mxu0 0.0
    %1853 = vmatprep.subr.mxu0 0.0
    %1854 = vmatpush1.msra.mxu0 0.0
    %1855 = vmatprep.subr.mxu0 0.0
    %1856 = vmatpush1.msra.mxu0 0.0
    %1857 = vmatprep.subr.mxu0 0.0
    %1858 = vmatpush1.msra.mxu0 0.0
    %1859 = vmatprep.subr.mxu0 0.0
    %1860 = vmatpush1.msra.mxu0 0.0
    %1861 = vmatprep.subr.mxu0 0.0
    %1862 = vmatpush1.msra.mxu0 0.0
    %1863 = vmatprep.subr.mxu0 0.0
    %1864 = vmatpush1.msra.mxu0 0.0
    %1865 = vmatprep.subr.mxu0 0.0
    %1866 = vmatpush1.msra.mxu0 0.0
    %1867 = vmatprep.subr.mxu0 0.0
    %1868 = vmatpush1.msra.mxu0 0.0
    %1869 = vmatprep.subr.mxu0 0.0
    %1870 = vmatpush1.msra.mxu0 0.0
    %1871 = vmatprep.subr.mxu0 0.0
    %1872 = vmatpush1.msra.mxu0 0.0
    %1873 = vmatprep.subr.mxu0 0.0
    %1874 = vmatpush1.msra.mxu0 0.0
    %1875 = vmatprep.subr.mxu0 0.0
    %1876 = vmatpush1.msra.mxu0 0.0
    %1877 = vmatprep.subr.mxu0 0.0
    %1878 = vmatpush1.msra.mxu0 0.0
    %1879 = vmatprep.subr.mxu0 0.0
    %1880 = vmatpush1.msra.mxu0 0.0
    %1881 = vmatprep.mubr.f32.mxu0 0.0
    %1882 = vmatmul.mubr.f32.gmra.mrb[0].mxu0 %v1723
    %v1883 = vpop.f32.mrb[0].mxu0
    %v1884 = vadd.f32 0.0, %v1883
    %v1885 = vpop.f32.mrb[0].mxu0
    %1886 = vmatprep.mubr.f32.mxu0 0.0
    %1887 = vmatmul.mubr.f32.gmra.mrb[0].mxu0 %v1728
    %v1888 = vpop.f32.mrb[0].mxu0
    %v1889 = vadd.f32 0.0, %v1888
    %v1890 = vpop.f32.mrb[0].mxu0
    %1891 = vmatprep.mubr.f32.mxu0 0.0
    %1892 = vmatmul.mubr.f32.gmra.mrb[0].mxu0 %v1733
    %v1893 = vpop.f32.mrb[0].mxu0
    %v1894 = vadd.f32 0.0, %v1893
    %v1895 = vpop.f32.mrb[0].mxu0
    %1896 = vmatprep.mubr.f32.mxu0 0.0
    %1897 = vmatmul.mubr.f32.gmra.mrb[0].mxu0 %v1738
    %v1898 = vpop.f32.mrb[0].mxu0
    %v1899 = vadd.f32 0.0, %v1898
    %v1900 = vpop.f32.mrb[0].mxu0
    %1901 = vmatprep.mubr.f32.mxu0 0.0
    %1902 = vmatmul.mubr.f32.gmra.mrb[0].mxu0 %v1743
    %v1903 = vpop.f32.mrb[0].mxu0
    %v1904 = vadd.f32 0.0, %v1903
    %v1905 = vpop.f32.mrb[0].mxu0
    %1906 = vmatprep.mubr.f32.mxu0 0.0
    %1907 = vmatmul.mubr.f32.gmra.mrb[0].mxu0 %v1748
    %v1908 = vpop.f32.mrb[0].mxu0
    %v1909 = vadd.f32 0.0, %v1908
    %v1910 = vpop.f32.mrb[0].mxu0
    %1911 = vmatprep.mubr.f32.mxu0 0.0
    %1912 = vmatmul.mubr.f32.gmra.mrb[0].mxu0 %v1753
    %v1913 = vpop.f32.mrb[0].mxu0
    %v1914 = vadd.f32 0.0, %v1913
    %v1915 = vpop.f32.mrb[0].mxu0
    %1916 = vmatprep.mubr.f32.mxu0 0.0
    %1917 = vmatmul.mubr.f32.gmra.mrb[0].mxu0 %v1758
    %v1918 = vpop.f32.mrb[0].mxu0
    %v1919 = vadd.f32 0.0, %v1918
    %v1920 = vpop.f32.mrb[0].mxu0
    %1921 = vmatprep.mubr.f32.mxu0 0.0
    %1922 = vmatmul.mubr.f32.gmra.mrb[0].mxu0 %v1763
    %v1923 = vpop.f32.mrb[0].mxu0
    %v1924 = vadd.f32 0.0, %v1923
    %v1925 = vpop.f32.mrb[0].mxu0
    %1926 = vmatprep.mubr.f32.mxu0 0.0
    %1927 = vmatmul.mubr.f32.gmra.mrb[0].mxu0 %v1768
    %v1928 = vpop.f32.mrb[0].mxu0
    %v1929 = vadd.f32 0.0, %v1928
    %v1930 = vpop.f32.mrb[0].mxu0
    %1931 = vmatprep.mubr.f32.mxu0 0.0
    %1932 = vmatmul.mubr.f32.gmra.mrb[0].mxu0 %v1773
    %v1933 = vpop.f32.mrb[0].mxu0
    %v1934 = vadd.f32 0.0, %v1933
    %v1935 = vpop.f32.mrb[0].mxu0
    %1936 = vmatprep.mubr.f32.mxu0 0.0
    %1937 = vmatmul.mubr.f32.gmra.mrb[0].mxu0 %v1778
    %v1938 = vpop.f32.mrb[0].mxu0
    %v1939 = vadd.f32 0.0, %v1938
    %v1940 = vpop.f32.mrb[0].mxu0
    %1941 = vmatprep.mubr.f32.mxu0 0.0
    %1942 = vmatmul.mubr.f32.gmra.mrb[0].mxu0 %v1783
    %v1943 = vpop.f32.mrb[0].mxu0
    %v1944 = vadd.f32 0.0, %v1943
    %v1945 = vpop.f32.mrb[0].mxu0
    %1946 = vmatprep.mubr.f32.mxu0 0.0
    %1947 = vmatmul.mubr.f32.gmra.mrb[0].mxu0 %v1788
    %v1948 = vpop.f32.mrb[0].mxu0
    %v1949 = vadd.f32 0.0, %v1948
    %v1950 = vpop.f32.mrb[0].mxu0
    %1951 = vmatprep.mubr.f32.mxu0 0.0
    %1952 = vmatmul.mubr.f32.gmra.mrb[0].mxu0 %v1793
    %v1953 = vpop.f32.mrb[0].mxu0
    %v1954 = vadd.f32 0.0, %v1953
    %v1955 = vpop.f32.mrb[0].mxu0
    %1956 = vmatprep.mubr.f32.mxu0 0.0
    %1957 = vmatmul.mubr.f32.gmra.mrb[0].mxu0 %v1798
    %v1958 = vpop.f32.mrb[0].mxu0
    %v1959 = vadd.f32 0.0, %v1958
    %v1960 = vpop.f32.mrb[0].mxu0
    %1961 = vdwg.mxu0
    %1962 = vmatprep.subr.mxu0 0.0
    %1963 = vmatpush1.msra.mxu0 %v1884
    %1964 = vmatprep.subr.mxu0 0.0
    %1965 = vmatpush1.msra.mxu0 %v1889
    %1966 = vmatprep.subr.mxu0 0.0
    %1967 = vmatpush1.msra.mxu0 %v1894
    %1968 = vmatprep.subr.mxu0 0.0
    %1969 = vmatpush1.msra.mxu0 %v1899
    %1970 = vmatprep.subr.mxu0 0.0
    %1971 = vmatpush1.msra.mxu0 %v1904
    %1972 = vmatprep.subr.mxu0 0.0
    %1973 = vmatpush1.msra.mxu0 %v1909
    %1974 = vmatprep.subr.mxu0 0.0
    %1975 = vmatpush1.msra.mxu0 %v1914
    %1976 = vmatprep.subr.mxu0 0.0
    %1977 = vmatpush1.msra.mxu0 %v1919
    %1978 = vmatprep.subr.mxu0 0.0
    %1979 = vmatpush1.msra.mxu0 %v1924
    %1980 = vmatprep.subr.mxu0 0.0
    %1981 = vmatpush1.msra.mxu0 %v1929
    %1982 = vmatprep.subr.mxu0 0.0
    %1983 = vmatpush1.msra.mxu0 %v1934
    %1984 = vmatprep.subr.mxu0 0.0
    %1985 = vmatpush1.msra.mxu0 %v1939
    %1986 = vmatprep.subr.mxu0 0.0
    %1987 = vmatpush1.msra.mxu0 %v1944
    %1988 = vmatprep.subr.mxu0 0.0
    %1989 = vmatpush1.msra.mxu0 %v1949
    %1990 = vmatprep.subr.mxu0 0.0
    %1991 = vmatpush1.msra.mxu0 %v1954
    %1992 = vmatprep.subr.mxu0 0.0
    %1993 = vmatpush1.msra.mxu0 %v1959
    %1994 = vmatprep.subr.mxu0 0.0
    %1995 = vmatpush1.msra.mxu0 0.0
    %1996 = vmatprep.subr.mxu0 0.0
    %1997 = vmatpush1.msra.mxu0 0.0
    %1998 = vmatprep.subr.mxu0 0.0
    %1999 = vmatpush1.msra.mxu0 0.0
    %2000 = vmatprep.subr.mxu0 0.0
    %2001 = vmatpush1.msra.mxu0 0.0
    %2002 = vmatprep.subr.mxu0 0.0
    %2003 = vmatpush1.msra.mxu0 0.0
    %2004 = vmatprep.subr.mxu0 0.0
    %2005 = vmatpush1.msra.mxu0 0.0
    %2006 = vmatprep.subr.mxu0 0.0
    %2007 = vmatpush1.msra.mxu0 0.0
    %2008 = vmatprep.subr.mxu0 0.0
    %2009 = vmatpush1.msra.mxu0 0.0
    %2010 = vmatprep.subr.mxu0 0.0
    %2011 = vmatpush1.msra.mxu0 0.0
    %2012 = vmatprep.subr.mxu0 0.0
    %2013 = vmatpush1.msra.mxu0 0.0
    %2014 = vmatprep.subr.mxu0 0.0
    %2015 = vmatpush1.msra.mxu0 0.0
    %2016 = vmatprep.subr.mxu0 0.0
    %2017 = vmatpush1.msra.mxu0 0.0
    %2018 = vmatprep.subr.mxu0 0.0
    %2019 = vmatpush1.msra.mxu0 0.0
    %2020 = vmatprep.subr.mxu0 0.0
    %2021 = vmatpush1.msra.mxu0 0.0
    %2022 = vmatprep.subr.mxu0 0.0
    %2023 = vmatpush1.msra.mxu0 0.0
    %2024 = vmatprep.subr.mxu0 0.0
    %2025 = vmatpush1.msra.mxu0 0.0
    %2026 = vmatprep.mubr.f32.mxu0 0.0
    %2027 = vmatmul.mubr.f32.gmra.mrb[0].mxu0 %v1801
    %v2028 = vpop.f32.mrb[0].mxu0
    %v2029 = vadd.f32 0.0, %v2028
    %v2030 = vpop.f32.mrb[0].mxu0
    %2031 = vmatprep.mubr.f32.mxu0 0.0
    %2032 = vmatmul.mubr.f32.gmra.mrb[0].mxu0 %v1802
    %v2033 = vpop.f32.mrb[0].mxu0
    %v2034 = vadd.f32 0.0, %v2033
    %v2035 = vpop.f32.mrb[0].mxu0
    %2036 = vmatprep.mubr.f32.mxu0 0.0
    %2037 = vmatmul.mubr.f32.gmra.mrb[0].mxu0 %v1803
    %v2038 = vpop.f32.mrb[0].mxu0
    %v2039 = vadd.f32 0.0, %v2038
    %v2040 = vpop.f32.mrb[0].mxu0
    %2041 = vmatprep.mubr.f32.mxu0 0.0
    %2042 = vmatmul.mubr.f32.gmra.mrb[0].mxu0 %v1804
    %v2043 = vpop.f32.mrb[0].mxu0
    %v2044 = vadd.f32 0.0, %v2043
    %v2045 = vpop.f32.mrb[0].mxu0
    %2046 = vmatprep.mubr.f32.mxu0 0.0
    %2047 = vmatmul.mubr.f32.gmra.mrb[0].mxu0 %v1805
    %v2048 = vpop.f32.mrb[0].mxu0
    %v2049 = vadd.f32 0.0, %v2048
    %v2050 = vpop.f32.mrb[0].mxu0
    %2051 = vmatprep.mubr.f32.mxu0 0.0
    %2052 = vmatmul.mubr.f32.gmra.mrb[0].mxu0 %v1806
    %v2053 = vpop.f32.mrb[0].mxu0
    %v2054 = vadd.f32 0.0, %v2053
    %v2055 = vpop.f32.mrb[0].mxu0
    %2056 = vmatprep.mubr.f32.mxu0 0.0
    %2057 = vmatmul.mubr.f32.gmra.mrb[0].mxu0 %v1807
    %v2058 = vpop.f32.mrb[0].mxu0
    %v2059 = vadd.f32 0.0, %v2058
    %v2060 = vpop.f32.mrb[0].mxu0
    %2061 = vmatprep.mubr.f32.mxu0 0.0
    %2062 = vmatmul.mubr.f32.gmra.mrb[0].mxu0 %v1808
    %v2063 = vpop.f32.mrb[0].mxu0
    %v2064 = vadd.f32 0.0, %v2063
    %v2065 = vpop.f32.mrb[0].mxu0
    %2066 = vmatprep.mubr.f32.mxu0 0.0
    %2067 = vmatmul.mubr.f32.gmra.mrb[0].mxu0 %v1809
    %v2068 = vpop.f32.mrb[0].mxu0
    %v2069 = vadd.f32 0.0, %v2068
    %v2070 = vpop.f32.mrb[0].mxu0
    %2071 = vmatprep.mubr.f32.mxu0 0.0
    %2072 = vmatmul.mubr.f32.gmra.mrb[0].mxu0 %v1810
    %v2073 = vpop.f32.mrb[0].mxu0
    %v2074 = vadd.f32 0.0, %v2073
    %v2075 = vpop.f32.mrb[0].mxu0
    %2076 = vmatprep.mubr.f32.mxu0 0.0
    %2077 = vmatmul.mubr.f32.gmra.mrb[0].mxu0 %v1811
    %v2078 = vpop.f32.mrb[0].mxu0
    %v2079 = vadd.f32 0.0, %v2078
    %v2080 = vpop.f32.mrb[0].mxu0
    %2081 = vmatprep.mubr.f32.mxu0 0.0
    %2082 = vmatmul.mubr.f32.gmra.mrb[0].mxu0 %v1812
    %v2083 = vpop.f32.mrb[0].mxu0
    %v2084 = vadd.f32 0.0, %v2083
    %v2085 = vpop.f32.mrb[0].mxu0
    %2086 = vmatprep.mubr.f32.mxu0 0.0
    %2087 = vmatmul.mubr.f32.gmra.mrb[0].mxu0 %v1813
    %v2088 = vpop.f32.mrb[0].mxu0
    %v2089 = vadd.f32 0.0, %v2088
    %v2090 = vpop.f32.mrb[0].mxu0
    %2091 = vmatprep.mubr.f32.mxu0 0.0
    %2092 = vmatmul.mubr.f32.gmra.mrb[0].mxu0 %v1814
    %v2093 = vpop.f32.mrb[0].mxu0
    %v2094 = vadd.f32 0.0, %v2093
    %v2095 = vpop.f32.mrb[0].mxu0
    %2096 = vmatprep.mubr.f32.mxu0 0.0
    %2097 = vmatmul.mubr.f32.gmra.mrb[0].mxu0 %v1815
    %v2098 = vpop.f32.mrb[0].mxu0
    %v2099 = vadd.f32 0.0, %v2098
    %v2100 = vpop.f32.mrb[0].mxu0
    %2101 = vmatprep.mubr.f32.mxu0 0.0
    %2102 = vmatmul.mubr.f32.gmra.mrb[0].mxu0 %v1816
    %v2103 = vpop.f32.mrb[0].mxu0
    %v2104 = vadd.f32 0.0, %v2103
    %v2105 = vpop.f32.mrb[0].mxu0
    %2106 = vdwg.mxu0
    %v2107 = vadd.f32 %v1801, %v2029
    %v2108 = vadd.f32 %v1802, %v2034
    %v2109 = vadd.f32 %v1803, %v2039
    %v2110 = vadd.f32 %v1804, %v2044
    %v2111 = vadd.f32 %v1805, %v2049
    %v2112 = vadd.f32 %v1806, %v2054
    %v2113 = vadd.f32 %v1807, %v2059
    %v2114 = vadd.f32 %v1808, %v2064
    %v2115 = vadd.f32 %v1809, %v2069
    %v2116 = vadd.f32 %v1810, %v2074
    %v2117 = vadd.f32 %v1811, %v2079
    %v2118 = vadd.f32 %v1812, %v2084
    %v2119 = vadd.f32 %v1813, %v2089
    %v2120 = vadd.f32 %v1814, %v2094
    %v2121 = vadd.f32 %v1815, %v2099
    %v2122 = vadd.f32 %v1816, %v2104
    %2123 = vmatprep.subr.mxu0 0.0
    %2124 = vmatpush1.msra.mxu0 %v1884
    %2125 = vmatprep.subr.mxu0 0.0
    %2126 = vmatpush1.msra.mxu0 %v1889
    %2127 = vmatprep.subr.mxu0 0.0
    %2128 = vmatpush1.msra.mxu0 %v1894
    %2129 = vmatprep.subr.mxu0 0.0
    %2130 = vmatpush1.msra.mxu0 %v1899
    %2131 = vmatprep.subr.mxu0 0.0
    %2132 = vmatpush1.msra.mxu0 %v1904
    %2133 = vmatprep.subr.mxu0 0.0
    %2134 = vmatpush1.msra.mxu0 %v1909
    %2135 = vmatprep.subr.mxu0 0.0
    %2136 = vmatpush1.msra.mxu0 %v1914
    %2137 = vmatprep.subr.mxu0 0.0
    %2138 = vmatpush1.msra.mxu0 %v1919
    %2139 = vmatprep.subr.mxu0 0.0
    %2140 = vmatpush1.msra.mxu0 %v1924
    %2141 = vmatprep.subr.mxu0 0.0
    %2142 = vmatpush1.msra.mxu0 %v1929
    %2143 = vmatprep.subr.mxu0 0.0
    %2144 = vmatpush1.msra.mxu0 %v1934
    %2145 = vmatprep.subr.mxu0 0.0
    %2146 = vmatpush1.msra.mxu0 %v1939
    %2147 = vmatprep.subr.mxu0 0.0
    %2148 = vmatpush1.msra.mxu0 %v1944
    %2149 = vmatprep.subr.mxu0 0.0
    %2150 = vmatpush1.msra.mxu0 %v1949
    %2151 = vmatprep.subr.mxu0 0.0
    %2152 = vmatpush1.msra.mxu0 %v1954
    %2153 = vmatprep.subr.mxu0 0.0
    %2154 = vmatpush1.msra.mxu0 %v1959
    %2155 = vmatprep.subr.mxu0 0.0
    %2156 = vmatpush1.msra.mxu0 0.0
    %2157 = vmatprep.subr.mxu0 0.0
    %2158 = vmatpush1.msra.mxu0 0.0
    %2159 = vmatprep.subr.mxu0 0.0
    %2160 = vmatpush1.msra.mxu0 0.0
    %2161 = vmatprep.subr.mxu0 0.0
    %2162 = vmatpush1.msra.mxu0 0.0
    %2163 = vmatprep.subr.mxu0 0.0
    %2164 = vmatpush1.msra.mxu0 0.0
    %2165 = vmatprep.subr.mxu0 0.0
    %2166 = vmatpush1.msra.mxu0 0.0
    %2167 = vmatprep.subr.mxu0 0.0
    %2168 = vmatpush1.msra.mxu0 0.0
    %2169 = vmatprep.subr.mxu0 0.0
    %2170 = vmatpush1.msra.mxu0 0.0
    %2171 = vmatprep.subr.mxu0 0.0
    %2172 = vmatpush1.msra.mxu0 0.0
    %2173 = vmatprep.subr.mxu0 0.0
    %2174 = vmatpush1.msra.mxu0 0.0
    %2175 = vmatprep.subr.mxu0 0.0
    %2176 = vmatpush1.msra.mxu0 0.0
    %2177 = vmatprep.subr.mxu0 0.0
    %2178 = vmatpush1.msra.mxu0 0.0
    %2179 = vmatprep.subr.mxu0 0.0
    %2180 = vmatpush1.msra.mxu0 0.0
    %2181 = vmatprep.subr.mxu0 0.0
    %2182 = vmatpush1.msra.mxu0 0.0
    %2183 = vmatprep.subr.mxu0 0.0
    %2184 = vmatpush1.msra.mxu0 0.0
    %2185 = vmatprep.subr.mxu0 0.0
    %2186 = vmatpush1.msra.mxu0 0.0
    %2187 = vmatprep.mubr.f32.mxu0 0.0
    %2188 = vmatmul.mubr.f32.gmra.mrb[0].mxu0 %v1884
    %v2189 = vpop.f32.mrb[0].mxu0
    %v2190 = vadd.f32 0.0, %v2189
    %v2191 = vpop.f32.mrb[0].mxu0
    %2192 = vmatprep.mubr.f32.mxu0 0.0
    %2193 = vmatmul.mubr.f32.gmra.mrb[0].mxu0 %v1889
    %v2194 = vpop.f32.mrb[0].mxu0
    %v2195 = vadd.f32 0.0, %v2194
    %v2196 = vpop.f32.mrb[0].mxu0
    %2197 = vmatprep.mubr.f32.mxu0 0.0
    %2198 = vmatmul.mubr.f32.gmra.mrb[0].mxu0 %v1894
    %v2199 = vpop.f32.mrb[0].mxu0
    %v2200 = vadd.f32 0.0, %v2199
    %v2201 = vpop.f32.mrb[0].mxu0
    %2202 = vmatprep.mubr.f32.mxu0 0.0
    %2203 = vmatmul.mubr.f32.gmra.mrb[0].mxu0 %v1899
    %v2204 = vpop.f32.mrb[0].mxu0
    %v2205 = vadd.f32 0.0, %v2204
    %v2206 = vpop.f32.mrb[0].mxu0
    %2207 = vmatprep.mubr.f32.mxu0 0.0
    %2208 = vmatmul.mubr.f32.gmra.mrb[0].mxu0 %v1904
    %v2209 = vpop.f32.mrb[0].mxu0
    %v2210 = vadd.f32 0.0, %v2209
    %v2211 = vpop.f32.mrb[0].mxu0
    %2212 = vmatprep.mubr.f32.mxu0 0.0
    %2213 = vmatmul.mubr.f32.gmra.mrb[0].mxu0 %v1909
    %v2214 = vpop.f32.mrb[0].mxu0
    %v2215 = vadd.f32 0.0, %v2214
    %v2216 = vpop.f32.mrb[0].mxu0
    %2217 = vmatprep.mubr.f32.mxu0 0.0
    %2218 = vmatmul.mubr.f32.gmra.mrb[0].mxu0 %v1914
    %v2219 = vpop.f32.mrb[0].mxu0
    %v2220 = vadd.f32 0.0, %v2219
    %v2221 = vpop.f32.mrb[0].mxu0
    %2222 = vmatprep.mubr.f32.mxu0 0.0
    %2223 = vmatmul.mubr.f32.gmra.mrb[0].mxu0 %v1919
    %v2224 = vpop.f32.mrb[0].mxu0
    %v2225 = vadd.f32 0.0, %v2224
    %v2226 = vpop.f32.mrb[0].mxu0
    %2227 = vmatprep.mubr.f32.mxu0 0.0
    %2228 = vmatmul.mubr.f32.gmra.mrb[0].mxu0 %v1924
    %v2229 = vpop.f32.mrb[0].mxu0
    %v2230 = vadd.f32 0.0, %v2229
    %v2231 = vpop.f32.mrb[0].mxu0
    %2232 = vmatprep.mubr.f32.mxu0 0.0
    %2233 = vmatmul.mubr.f32.gmra.mrb[0].mxu0 %v1929
    %v2234 = vpop.f32.mrb[0].mxu0
    %v2235 = vadd.f32 0.0, %v2234
    %v2236 = vpop.f32.mrb[0].mxu0
    %2237 = vmatprep.mubr.f32.mxu0 0.0
    %2238 = vmatmul.mubr.f32.gmra.mrb[0].mxu0 %v1934
    %v2239 = vpop.f32.mrb[0].mxu0
    %v2240 = vadd.f32 0.0, %v2239
    %v2241 = vpop.f32.mrb[0].mxu0
    %2242 = vmatprep.mubr.f32.mxu0 0.0
    %2243 = vmatmul.mubr.f32.gmra.mrb[0].mxu0 %v1939
    %v2244 = vpop.f32.mrb[0].mxu0
    %v2245 = vadd.f32 0.0, %v2244
    %v2246 = vpop.f32.mrb[0].mxu0
    %2247 = vmatprep.mubr.f32.mxu0 0.0
    %2248 = vmatmul.mubr.f32.gmra.mrb[0].mxu0 %v1944
    %v2249 = vpop.f32.mrb[0].mxu0
    %v2250 = vadd.f32 0.0, %v2249
    %v2251 = vpop.f32.mrb[0].mxu0
    %2252 = vmatprep.mubr.f32.mxu0 0.0
    %2253 = vmatmul.mubr.f32.gmra.mrb[0].mxu0 %v1949
    %v2254 = vpop.f32.mrb[0].mxu0
    %v2255 = vadd.f32 0.0, %v2254
    %v2256 = vpop.f32.mrb[0].mxu0
    %2257 = vmatprep.mubr.f32.mxu0 0.0
    %2258 = vmatmul.mubr.f32.gmra.mrb[0].mxu0 %v1954
    %v2259 = vpop.f32.mrb[0].mxu0
    %v2260 = vadd.f32 0.0, %v2259
    %v2261 = vpop.f32.mrb[0].mxu0
    %2262 = vmatprep.mubr.f32.mxu0 0.0
    %2263 = vmatmul.mubr.f32.gmra.mrb[0].mxu0 %v1959
    %v2264 = vpop.f32.mrb[0].mxu0
    %v2265 = vadd.f32 0.0, %v2264
    %v2266 = vpop.f32.mrb[0].mxu0
    %2267 = vdwg.mxu0
    %2268 = vmatprep.subr.mxu0 0.0
    %2269 = vmatpush1.msra.mxu0 %v2190
    %2270 = vmatprep.subr.mxu0 0.0
    %2271 = vmatpush1.msra.mxu0 %v2195
    %2272 = vmatprep.subr.mxu0 0.0
    %2273 = vmatpush1.msra.mxu0 %v2200
    %2274 = vmatprep.subr.mxu0 0.0
    %2275 = vmatpush1.msra.mxu0 %v2205
    %2276 = vmatprep.subr.mxu0 0.0
    %2277 = vmatpush1.msra.mxu0 %v2210
    %2278 = vmatprep.subr.mxu0 0.0
    %2279 = vmatpush1.msra.mxu0 %v2215
    %2280 = vmatprep.subr.mxu0 0.0
    %2281 = vmatpush1.msra.mxu0 %v2220
    %2282 = vmatprep.subr.mxu0 0.0
    %2283 = vmatpush1.msra.mxu0 %v2225
    %2284 = vmatprep.subr.mxu0 0.0
    %2285 = vmatpush1.msra.mxu0 %v2230
    %2286 = vmatprep.subr.mxu0 0.0
    %2287 = vmatpush1.msra.mxu0 %v2235
    %2288 = vmatprep.subr.mxu0 0.0
    %2289 = vmatpush1.msra.mxu0 %v2240
    %2290 = vmatprep.subr.mxu0 0.0
    %2291 = vmatpush1.msra.mxu0 %v2245
    %2292 = vmatprep.subr.mxu0 0.0
    %2293 = vmatpush1.msra.mxu0 %v2250
    %2294 = vmatprep.subr.mxu0 0.0
    %2295 = vmatpush1.msra.mxu0 %v2255
    %2296 = vmatprep.subr.mxu0 0.0
    %2297 = vmatpush1.msra.mxu0 %v2260
    %2298 = vmatprep.subr.mxu0 0.0
    %2299 = vmatpush1.msra.mxu0 %v2265
    %2300 = vmatprep.subr.mxu0 0.0
    %2301 = vmatpush1.msra.mxu0 0.0
    %2302 = vmatprep.subr.mxu0 0.0
    %2303 = vmatpush1.msra.mxu0 0.0
    %2304 = vmatprep.subr.mxu0 0.0
    %2305 = vmatpush1.msra.mxu0 0.0
    %2306 = vmatprep.subr.mxu0 0.0
    %2307 = vmatpush1.msra.mxu0 0.0
    %2308 = vmatprep.subr.mxu0 0.0
    %2309 = vmatpush1.msra.mxu0 0.0
    %2310 = vmatprep.subr.mxu0 0.0
    %2311 = vmatpush1.msra.mxu0 0.0
    %2312 = vmatprep.subr.mxu0 0.0
    %2313 = vmatpush1.msra.mxu0 0.0
    %2314 = vmatprep.subr.mxu0 0.0
    %2315 = vmatpush1.msra.mxu0 0.0
    %2316 = vmatprep.subr.mxu0 0.0
    %2317 = vmatpush1.msra.mxu0 0.0
    %2318 = vmatprep.subr.mxu0 0.0
    %2319 = vmatpush1.msra.mxu0 0.0
    %2320 = vmatprep.subr.mxu0 0.0
    %2321 = vmatpush1.msra.mxu0 0.0
    %2322 = vmatprep.subr.mxu0 0.0
    %2323 = vmatpush1.msra.mxu0 0.0
    %2324 = vmatprep.subr.mxu0 0.0
    %2325 = vmatpush1.msra.mxu0 0.0
    %2326 = vmatprep.subr.mxu0 0.0
    %2327 = vmatpush1.msra.mxu0 0.0
    %2328 = vmatprep.subr.mxu0 0.0
    %2329 = vmatpush1.msra.mxu0 0.0
    %2330 = vmatprep.subr.mxu0 0.0
    %2331 = vmatpush1.msra.mxu0 0.0
    %2332 = vmatprep.mubr.f32.mxu0 0.0
    %2333 = vmatmul.mubr.f32.gmra.mrb[0].mxu0 %v2107
    %v2334 = vpop.f32.mrb[0].mxu0
    %v2335 = vadd.f32 0.0, %v2334
    %v2336 = vpop.f32.mrb[0].mxu0
    %2337 = vmatprep.mubr.f32.mxu0 0.0
    %2338 = vmatmul.mubr.f32.gmra.mrb[0].mxu0 %v2108
    %v2339 = vpop.f32.mrb[0].mxu0
    %v2340 = vadd.f32 0.0, %v2339
    %v2341 = vpop.f32.mrb[0].mxu0
    %2342 = vmatprep.mubr.f32.mxu0 0.0
    %2343 = vmatmul.mubr.f32.gmra.mrb[0].mxu0 %v2109
    %v2344 = vpop.f32.mrb[0].mxu0
    %v2345 = vadd.f32 0.0, %v2344
    %v2346 = vpop.f32.mrb[0].mxu0
    %2347 = vmatprep.mubr.f32.mxu0 0.0
    %2348 = vmatmul.mubr.f32.gmra.mrb[0].mxu0 %v2110
    %v2349 = vpop.f32.mrb[0].mxu0
    %v2350 = vadd.f32 0.0, %v2349
    %v2351 = vpop.f32.mrb[0].mxu0
    %2352 = vmatprep.mubr.f32.mxu0 0.0
    %2353 = vmatmul.mubr.f32.gmra.mrb[0].mxu0 %v2111
    %v2354 = vpop.f32.mrb[0].mxu0
    %v2355 = vadd.f32 0.0, %v2354
    %v2356 = vpop.f32.mrb[0].mxu0
    %2357 = vmatprep.mubr.f32.mxu0 0.0
    %2358 = vmatmul.mubr.f32.gmra.mrb[0].mxu0 %v2112
    %v2359 = vpop.f32.mrb[0].mxu0
    %v2360 = vadd.f32 0.0, %v2359
    %v2361 = vpop.f32.mrb[0].mxu0
    %2362 = vmatprep.mubr.f32.mxu0 0.0
    %2363 = vmatmul.mubr.f32.gmra.mrb[0].mxu0 %v2113
    %v2364 = vpop.f32.mrb[0].mxu0
    %v2365 = vadd.f32 0.0, %v2364
    %v2366 = vpop.f32.mrb[0].mxu0
    %2367 = vmatprep.mubr.f32.mxu0 0.0
    %2368 = vmatmul.mubr.f32.gmra.mrb[0].mxu0 %v2114
    %v2369 = vpop.f32.mrb[0].mxu0
    %v2370 = vadd.f32 0.0, %v2369
    %v2371 = vpop.f32.mrb[0].mxu0
    %2372 = vmatprep.mubr.f32.mxu0 0.0
    %2373 = vmatmul.mubr.f32.gmra.mrb[0].mxu0 %v2115
    %v2374 = vpop.f32.mrb[0].mxu0
    %v2375 = vadd.f32 0.0, %v2374
    %v2376 = vpop.f32.mrb[0].mxu0
    %2377 = vmatprep.mubr.f32.mxu0 0.0
    %2378 = vmatmul.mubr.f32.gmra.mrb[0].mxu0 %v2116
    %v2379 = vpop.f32.mrb[0].mxu0
    %v2380 = vadd.f32 0.0, %v2379
    %v2381 = vpop.f32.mrb[0].mxu0
    %2382 = vmatprep.mubr.f32.mxu0 0.0
    %2383 = vmatmul.mubr.f32.gmra.mrb[0].mxu0 %v2117
    %v2384 = vpop.f32.mrb[0].mxu0
    %v2385 = vadd.f32 0.0, %v2384
    %v2386 = vpop.f32.mrb[0].mxu0
    %2387 = vmatprep.mubr.f32.mxu0 0.0
    %2388 = vmatmul.mubr.f32.gmra.mrb[0].mxu0 %v2118
    %v2389 = vpop.f32.mrb[0].mxu0
    %v2390 = vadd.f32 0.0, %v2389
    %v2391 = vpop.f32.mrb[0].mxu0
    %2392 = vmatprep.mubr.f32.mxu0 0.0
    %2393 = vmatmul.mubr.f32.gmra.mrb[0].mxu0 %v2119
    %v2394 = vpop.f32.mrb[0].mxu0
    %v2395 = vadd.f32 0.0, %v2394
    %v2396 = vpop.f32.mrb[0].mxu0
    %2397 = vmatprep.mubr.f32.mxu0 0.0
    %2398 = vmatmul.mubr.f32.gmra.mrb[0].mxu0 %v2120
    %v2399 = vpop.f32.mrb[0].mxu0
    %v2400 = vadd.f32 0.0, %v2399
    %v2401 = vpop.f32.mrb[0].mxu0
    %2402 = vmatprep.mubr.f32.mxu0 0.0
    %2403 = vmatmul.mubr.f32.gmra.mrb[0].mxu0 %v2121
    %v2404 = vpop.f32.mrb[0].mxu0
    %v2405 = vadd.f32 0.0, %v2404
    %v2406 = vpop.f32.mrb[0].mxu0
    %2407 = vmatprep.mubr.f32.mxu0 0.0
    %2408 = vmatmul.mubr.f32.gmra.mrb[0].mxu0 %v2122
    %v2409 = vpop.f32.mrb[0].mxu0
    %v2410 = vadd.f32 0.0, %v2409
    %v2411 = vpop.f32.mrb[0].mxu0
    %2412 = vdwg.mxu0
    %v2413 = vadd.f32 %v2107, %v2335
    %v2414 = vadd.f32 %v2108, %v2340
    %v2415 = vadd.f32 %v2109, %v2345
    %v2416 = vadd.f32 %v2110, %v2350
    %v2417 = vadd.f32 %v2111, %v2355
    %v2418 = vadd.f32 %v2112, %v2360
    %v2419 = vadd.f32 %v2113, %v2365
    %v2420 = vadd.f32 %v2114, %v2370
    %v2421 = vadd.f32 %v2115, %v2375
    %v2422 = vadd.f32 %v2116, %v2380
    %v2423 = vadd.f32 %v2117, %v2385
    %v2424 = vadd.f32 %v2118, %v2390
    %v2425 = vadd.f32 %v2119, %v2395
    %v2426 = vadd.f32 %v2120, %v2400
    %v2427 = vadd.f32 %v2121, %v2405
    %v2428 = vadd.f32 %v2122, %v2410
    %2429 = vmatprep.subr.mxu0 0.0
    %2430 = vmatpush1.msra.mxu0 %v2190
    %2431 = vmatprep.subr.mxu0 0.0
    %2432 = vmatpush1.msra.mxu0 %v2195
    %2433 = vmatprep.subr.mxu0 0.0
    %2434 = vmatpush1.msra.mxu0 %v2200
    %2435 = vmatprep.subr.mxu0 0.0
    %2436 = vmatpush1.msra.mxu0 %v2205
    %2437 = vmatprep.subr.mxu0 0.0
    %2438 = vmatpush1.msra.mxu0 %v2210
    %2439 = vmatprep.subr.mxu0 0.0
    %2440 = vmatpush1.msra.mxu0 %v2215
    %2441 = vmatprep.subr.mxu0 0.0
    %2442 = vmatpush1.msra.mxu0 %v2220
    %2443 = vmatprep.subr.mxu0 0.0
    %2444 = vmatpush1.msra.mxu0 %v2225
    %2445 = vmatprep.subr.mxu0 0.0
    %2446 = vmatpush1.msra.mxu0 %v2230
    %2447 = vmatprep.subr.mxu0 0.0
    %2448 = vmatpush1.msra.mxu0 %v2235
    %2449 = vmatprep.subr.mxu0 0.0
    %2450 = vmatpush1.msra.mxu0 %v2240
    %2451 = vmatprep.subr.mxu0 0.0
    %2452 = vmatpush1.msra.mxu0 %v2245
    %2453 = vmatprep.subr.mxu0 0.0
    %2454 = vmatpush1.msra.mxu0 %v2250
    %2455 = vmatprep.subr.mxu0 0.0
    %2456 = vmatpush1.msra.mxu0 %v2255
    %2457 = vmatprep.subr.mxu0 0.0
    %2458 = vmatpush1.msra.mxu0 %v2260
    %2459 = vmatprep.subr.mxu0 0.0
    %2460 = vmatpush1.msra.mxu0 %v2265
    %2461 = vmatprep.subr.mxu0 0.0
    %2462 = vmatpush1.msra.mxu0 0.0
    %2463 = vmatprep.subr.mxu0 0.0
    %2464 = vmatpush1.msra.mxu0 0.0
    %2465 = vmatprep.subr.mxu0 0.0
    %2466 = vmatpush1.msra.mxu0 0.0
    %2467 = vmatprep.subr.mxu0 0.0
    %2468 = vmatpush1.msra.mxu0 0.0
    %2469 = vmatprep.subr.mxu0 0.0
    %2470 = vmatpush1.msra.mxu0 0.0
    %2471 = vmatprep.subr.mxu0 0.0
    %2472 = vmatpush1.msra.mxu0 0.0
    %2473 = vmatprep.subr.mxu0 0.0
    %2474 = vmatpush1.msra.mxu0 0.0
    %2475 = vmatprep.subr.mxu0 0.0
    %2476 = vmatpush1.msra.mxu0 0.0
    %2477 = vmatprep.subr.mxu0 0.0
    %2478 = vmatpush1.msra.mxu0 0.0
    %2479 = vmatprep.subr.mxu0 0.0
    %2480 = vmatpush1.msra.mxu0 0.0
    %2481 = vmatprep.subr.mxu0 0.0
    %2482 = vmatpush1.msra.mxu0 0.0
    %2483 = vmatprep.subr.mxu0 0.0
    %2484 = vmatpush1.msra.mxu0 0.0
    %2485 = vmatprep.subr.mxu0 0.0
    %2486 = vmatpush1.msra.mxu0 0.0
    %2487 = vmatprep.subr.mxu0 0.0
    %2488 = vmatpush1.msra.mxu0 0.0
    %2489 = vmatprep.subr.mxu0 0.0
    %2490 = vmatpush1.msra.mxu0 0.0
    %2491 = vmatprep.subr.mxu0 0.0
    %2492 = vmatpush1.msra.mxu0 0.0
    %2493 = vmatprep.mubr.f32.mxu0 0.0
    %2494 = vmatmul.mubr.f32.gmra.mrb[0].mxu0 %v2190
    %v2495 = vpop.f32.mrb[0].mxu0
    %v2496 = vadd.f32 0.0, %v2495
    %v2497 = vpop.f32.mrb[0].mxu0
    %2498 = vmatprep.mubr.f32.mxu0 0.0
    %2499 = vmatmul.mubr.f32.gmra.mrb[0].mxu0 %v2195
    %v2500 = vpop.f32.mrb[0].mxu0
    %v2501 = vadd.f32 0.0, %v2500
    %v2502 = vpop.f32.mrb[0].mxu0
    %2503 = vmatprep.mubr.f32.mxu0 0.0
    %2504 = vmatmul.mubr.f32.gmra.mrb[0].mxu0 %v2200
    %v2505 = vpop.f32.mrb[0].mxu0
    %v2506 = vadd.f32 0.0, %v2505
    %v2507 = vpop.f32.mrb[0].mxu0
    %2508 = vmatprep.mubr.f32.mxu0 0.0
    %2509 = vmatmul.mubr.f32.gmra.mrb[0].mxu0 %v2205
    %v2510 = vpop.f32.mrb[0].mxu0
    %v2511 = vadd.f32 0.0, %v2510
    %v2512 = vpop.f32.mrb[0].mxu0
    %2513 = vmatprep.mubr.f32.mxu0 0.0
    %2514 = vmatmul.mubr.f32.gmra.mrb[0].mxu0 %v2210
    %v2515 = vpop.f32.mrb[0].mxu0
    %v2516 = vadd.f32 0.0, %v2515
    %v2517 = vpop.f32.mrb[0].mxu0
    %2518 = vmatprep.mubr.f32.mxu0 0.0
    %2519 = vmatmul.mubr.f32.gmra.mrb[0].mxu0 %v2215
    %v2520 = vpop.f32.mrb[0].mxu0
    %v2521 = vadd.f32 0.0, %v2520
    %v2522 = vpop.f32.mrb[0].mxu0
    %2523 = vmatprep.mubr.f32.mxu0 0.0
    %2524 = vmatmul.mubr.f32.gmra.mrb[0].mxu0 %v2220
    %v2525 = vpop.f32.mrb[0].mxu0
    %v2526 = vadd.f32 0.0, %v2525
    %v2527 = vpop.f32.mrb[0].mxu0
    %2528 = vmatprep.mubr.f32.mxu0 0.0
    %2529 = vmatmul.mubr.f32.gmra.mrb[0].mxu0 %v2225
    %v2530 = vpop.f32.mrb[0].mxu0
    %v2531 = vadd.f32 0.0, %v2530
    %v2532 = vpop.f32.mrb[0].mxu0
    %2533 = vmatprep.mubr.f32.mxu0 0.0
    %2534 = vmatmul.mubr.f32.gmra.mrb[0].mxu0 %v2230
    %v2535 = vpop.f32.mrb[0].mxu0
    %v2536 = vadd.f32 0.0, %v2535
    %v2537 = vpop.f32.mrb[0].mxu0
    %2538 = vmatprep.mubr.f32.mxu0 0.0
    %2539 = vmatmul.mubr.f32.gmra.mrb[0].mxu0 %v2235
    %v2540 = vpop.f32.mrb[0].mxu0
    %v2541 = vadd.f32 0.0, %v2540
    %v2542 = vpop.f32.mrb[0].mxu0
    %2543 = vmatprep.mubr.f32.mxu0 0.0
    %2544 = vmatmul.mubr.f32.gmra.mrb[0].mxu0 %v2240
    %v2545 = vpop.f32.mrb[0].mxu0
    %v2546 = vadd.f32 0.0, %v2545
    %v2547 = vpop.f32.mrb[0].mxu0
    %2548 = vmatprep.mubr.f32.mxu0 0.0
    %2549 = vmatmul.mubr.f32.gmra.mrb[0].mxu0 %v2245
    %v2550 = vpop.f32.mrb[0].mxu0
    %v2551 = vadd.f32 0.0, %v2550
    %v2552 = vpop.f32.mrb[0].mxu0
    %2553 = vmatprep.mubr.f32.mxu0 0.0
    %2554 = vmatmul.mubr.f32.gmra.mrb[0].mxu0 %v2250
    %v2555 = vpop.f32.mrb[0].mxu0
    %v2556 = vadd.f32 0.0, %v2555
    %v2557 = vpop.f32.mrb[0].mxu0
    %2558 = vmatprep.mubr.f32.mxu0 0.0
    %2559 = vmatmul.mubr.f32.gmra.mrb[0].mxu0 %v2255
    %v2560 = vpop.f32.mrb[0].mxu0
    %v2561 = vadd.f32 0.0, %v2560
    %v2562 = vpop.f32.mrb[0].mxu0
    %2563 = vmatprep.mubr.f32.mxu0 0.0
    %2564 = vmatmul.mubr.f32.gmra.mrb[0].mxu0 %v2260
    %v2565 = vpop.f32.mrb[0].mxu0
    %v2566 = vadd.f32 0.0, %v2565
    %v2567 = vpop.f32.mrb[0].mxu0
    %2568 = vmatprep.mubr.f32.mxu0 0.0
    %2569 = vmatmul.mubr.f32.gmra.mrb[0].mxu0 %v2265
    %v2570 = vpop.f32.mrb[0].mxu0
    %v2571 = vadd.f32 0.0, %v2570
    %v2572 = vpop.f32.mrb[0].mxu0
    %2573 = vdwg.mxu0
    %v2574 = vld [vmem:[#allocation2] sm:$0xff]
    %2575 = vmatprep.subr.mxu0 0.0
    %2576 = vmatpush1.msra.mxu0 %v2413
    %2577 = vmatprep.subr.mxu0 0.0
    %2578 = vmatpush1.msra.mxu0 %v2414
    %2579 = vmatprep.subr.mxu0 0.0
    %2580 = vmatpush1.msra.mxu0 %v2415
    %2581 = vmatprep.subr.mxu0 0.0
    %2582 = vmatpush1.msra.mxu0 %v2416
    %2583 = vmatprep.subr.mxu0 0.0
    %2584 = vmatpush1.msra.mxu0 %v2417
    %2585 = vmatprep.subr.mxu0 0.0
    %2586 = vmatpush1.msra.mxu0 %v2418
    %2587 = vmatprep.subr.mxu0 0.0
    %2588 = vmatpush1.msra.mxu0 %v2419
    %2589 = vmatprep.subr.mxu0 0.0
    %2590 = vmatpush1.msra.mxu0 %v2420
    %2591 = vmatprep.subr.mxu0 0.0
    %2592 = vmatpush1.msra.mxu0 %v2421
    %2593 = vmatprep.subr.mxu0 0.0
    %2594 = vmatpush1.msra.mxu0 %v2422
    %2595 = vmatprep.subr.mxu0 0.0
    %2596 = vmatpush1.msra.mxu0 %v2423
    %2597 = vmatprep.subr.mxu0 0.0
    %2598 = vmatpush1.msra.mxu0 %v2424
    %2599 = vmatprep.subr.mxu0 0.0
    %2600 = vmatpush1.msra.mxu0 %v2425
    %2601 = vmatprep.subr.mxu0 0.0
    %2602 = vmatpush1.msra.mxu0 %v2426
    %2603 = vmatprep.subr.mxu0 0.0
    %2604 = vmatpush1.msra.mxu0 %v2427
    %2605 = vmatprep.subr.mxu0 0.0
    %2606 = vmatpush1.msra.mxu0 %v2428
    %2607 = vmatprep.subr.mxu0 0.0
    %2608 = vmatpush1.msra.mxu0 0.0
    %2609 = vmatprep.subr.mxu0 0.0
    %2610 = vmatpush1.msra.mxu0 0.0
    %2611 = vmatprep.subr.mxu0 0.0
    %2612 = vmatpush1.msra.mxu0 0.0
    %2613 = vmatprep.subr.mxu0 0.0
    %2614 = vmatpush1.msra.mxu0 0.0
    %2615 = vmatprep.subr.mxu0 0.0
    %2616 = vmatpush1.msra.mxu0 0.0
    %2617 = vmatprep.subr.mxu0 0.0
    %2618 = vmatpush1.msra.mxu0 0.0
    %2619 = vmatprep.subr.mxu0 0.0
    %2620 = vmatpush1.msra.mxu0 0.0
    %2621 = vmatprep.subr.mxu0 0.0
    %2622 = vmatpush1.msra.mxu0 0.0
    %2623 = vmatprep.subr.mxu0 0.0
    %2624 = vmatpush1.msra.mxu0 0.0
    %2625 = vmatprep.subr.mxu0 0.0
    %2626 = vmatpush1.msra.mxu0 0.0
    %2627 = vmatprep.subr.mxu0 0.0
    %2628 = vmatpush1.msra.mxu0 0.0
    %2629 = vmatprep.subr.mxu0 0.0
    %2630 = vmatpush1.msra.mxu0 0.0
    %2631 = vmatprep.subr.mxu0 0.0
    %2632 = vmatpush1.msra.mxu0 0.0
    %2633 = vmatprep.subr.mxu0 0.0
    %2634 = vmatpush1.msra.mxu0 0.0
    %2635 = vmatprep.subr.mxu0 0.0
    %2636 = vmatpush1.msra.mxu0 0.0
    %2637 = vmatprep.subr.mxu0 0.0
    %2638 = vmatpush1.msra.mxu0 0.0
    %2639 = vmatprep.mubr.f32.mxu0 0.0
    %2640 = vmatmul.mubr.f32.gmra.mrb[0].mxu0 %v362
    %v2641 = vpop.f32.mrb[0].mxu0
    %v2642 = vadd.f32 0.0, %v2641
    %v2643 = vpop.f32.mrb[0].mxu0
    %2644 = vdwg.mxu0
    %2645 = vmatprep.subr.mxu0 0.0
    %2646 = vmatpush1.msra.mxu0 %v2496
    %2647 = vmatprep.subr.mxu0 0.0
    %2648 = vmatpush1.msra.mxu0 %v2501
    %2649 = vmatprep.subr.mxu0 0.0
    %2650 = vmatpush1.msra.mxu0 %v2506
    %2651 = vmatprep.subr.mxu0 0.0
    %2652 = vmatpush1.msra.mxu0 %v2511
    %2653 = vmatprep.subr.mxu0 0.0
    %2654 = vmatpush1.msra.mxu0 %v2516
    %2655 = vmatprep.subr.mxu0 0.0
    %2656 = vmatpush1.msra.mxu0 %v2521
    %2657 = vmatprep.subr.mxu0 0.0
    %2658 = vmatpush1.msra.mxu0 %v2526
    %2659 = vmatprep.subr.mxu0 0.0
    %2660 = vmatpush1.msra.mxu0 %v2531
    %2661 = vmatprep.subr.mxu0 0.0
    %2662 = vmatpush1.msra.mxu0 %v2536
    %2663 = vmatprep.subr.mxu0 0.0
    %2664 = vmatpush1.msra.mxu0 %v2541
    %2665 = vmatprep.subr.mxu0 0.0
    %2666 = vmatpush1.msra.mxu0 %v2546
    %2667 = vmatprep.subr.mxu0 0.0
    %2668 = vmatpush1.msra.mxu0 %v2551
    %2669 = vmatprep.subr.mxu0 0.0
    %2670 = vmatpush1.msra.mxu0 %v2556
    %2671 = vmatprep.subr.mxu0 0.0
    %2672 = vmatpush1.msra.mxu0 %v2561
    %2673 = vmatprep.subr.mxu0 0.0
    %2674 = vmatpush1.msra.mxu0 %v2566
    %2675 = vmatprep.subr.mxu0 0.0
    %2676 = vmatpush1.msra.mxu0 %v2571
    %2677 = vmatprep.subr.mxu0 0.0
    %2678 = vmatpush1.msra.mxu0 0.0
    %2679 = vmatprep.subr.mxu0 0.0
    %2680 = vmatpush1.msra.mxu0 0.0
    %2681 = vmatprep.subr.mxu0 0.0
    %2682 = vmatpush1.msra.mxu0 0.0
    %2683 = vmatprep.subr.mxu0 0.0
    %2684 = vmatpush1.msra.mxu0 0.0
    %2685 = vmatprep.subr.mxu0 0.0
    %2686 = vmatpush1.msra.mxu0 0.0
    %2687 = vmatprep.subr.mxu0 0.0
    %2688 = vmatpush1.msra.mxu0 0.0
    %2689 = vmatprep.subr.mxu0 0.0
    %2690 = vmatpush1.msra.mxu0 0.0
    %2691 = vmatprep.subr.mxu0 0.0
    %2692 = vmatpush1.msra.mxu0 0.0
    %2693 = vmatprep.subr.mxu0 0.0
    %2694 = vmatpush1.msra.mxu0 0.0
    %2695 = vmatprep.subr.mxu0 0.0
    %2696 = vmatpush1.msra.mxu0 0.0
    %2697 = vmatprep.subr.mxu0 0.0
    %2698 = vmatpush1.msra.mxu0 0.0
    %2699 = vmatprep.subr.mxu0 0.0
    %2700 = vmatpush1.msra.mxu0 0.0
    %2701 = vmatprep.subr.mxu0 0.0
    %2702 = vmatpush1.msra.mxu0 0.0
    %2703 = vmatprep.subr.mxu0 0.0
    %2704 = vmatpush1.msra.mxu0 0.0
    %2705 = vmatprep.subr.mxu0 0.0
    %2706 = vmatpush1.msra.mxu0 0.0
    %2707 = vmatprep.subr.mxu0 0.0
    %2708 = vmatpush1.msra.mxu0 0.0
    %2709 = vmatprep.mubr.f32.mxu0 0.0
    %2710 = vmatmul.mubr.f32.gmra.mrb[0].mxu0 %v2574
    %v2711 = vpop.f32.mrb[0].mxu0
    %v2712 = vadd.f32 %v2642, %v2711
    %v2713 = vpop.f32.mrb[0].mxu0
    %2714 = vdwg.mxu0
    %v2715 = vmul.f32 %v2712, %v2712
    %2716 = vadd.xlane.f32.xlu0 %v2715
    %v2717 = vpop.xlane.xlu0 %2716
    %v2718 = vrot.slane %v2717, 4
    %v2719 = vadd.f32 %v2717, %v2718
    %v2720 = vrot.slane %v2719, 2
    %v2721 = vadd.f32 %v2719, %v2720
    %v2722 = vrot.slane %v2721, 1
    %v2723 = vadd.f32 %v2721, %v2722
    %s2724 = vtos %v2723
    %v2725 = vstv %s2724
    %2726 = vst [vmem:[#allocation11] sm:$0x1] %v2725
    // Predicated region
    $region42: #{tpu_custom_call.1} parent=1 // pred_check
      _
    $region43: #{tpu_custom_call.1} parent=1 // pred_check_branch
      %2728 = sbr.rel (0) target = $region45
    $region44: #{tpu_custom_call.1} parent=1 // pred_region
      %s2730 = ssub.s32 16, 16
      %2731 = vsyncadd [#allocation4], %s2730
      %s2733 = sshll.u32 [#allocation11], 4
      %s2734 = int_to_ptr.vmem [resolvable:$true] %s2733
      %2736 = dma.vmem_to_hbm [thread:$0]  %s2734, 16, %s5, [#allocation4]
    $region45: #{tpu_custom_call.1} parent=1 // pred_fallthru
      _
    // Predicated region
    $region46: #{tpu_custom_call.1} parent=1 // pred_check
      _
    $region47: #{tpu_custom_call.1} parent=1 // pred_check_branch
      %2738 = sbr.rel (0) target = $region49
    $region48: #{tpu_custom_call.1} parent=1 // pred_region
      %2739 = dma.done [#allocation4], 16
    $region49: #{tpu_custom_call.1} parent=1 // pred_fallthru
      _
    %2740 = vsyncpa [#allocation3], 1
    %2741 = vsyncpa [#allocation6], 1
    %2742 = vsyncpa [#allocation9], 1
    %2743 = vsyncpa [#allocation4], 1

</llo_original>
